<compile_context>
chip_gen: v7x
topology: tpu7x:2x2x1
jax: 0.10.0
libtpu: 0.0.40
codegen_flags: <defaults>
</compile_context>

<pallas_src>
import jax
import jax.numpy as jnp
from jax.experimental import pallas as pl
from jax.experimental.pallas import tpu as pltpu


def _vmem_capacity_bytes():
    try:
        return int(pltpu.get_tpu_info().vmem_capacity_bytes)
    except Exception:
        return 64 * 1024 * 1024   # conservative fallback (v7x per-TC VMEM)


# -----------------------------------------------------------------------------
# Pass 1: attention weights  attn = softmax(keys @ key)  -> (S, 1)
# -----------------------------------------------------------------------------
def mem_attn_weights_kernel(key_ref, keys_ref, attn_ref):
    """key_ref: (1, K), keys_ref: (S, K), attn_ref: (S, 1); all VMEM-resident."""
    # Logits on the VPU: broadcast-multiply + lane reduce. (The MXU is idle in
    # this kernel; for large S an (S,K)@(K,1) jnp.dot would also be fine.)
    logits = jnp.sum(keys_ref[...] * key_ref[...], axis=1, keepdims=True)   # (S, 1)
    m = jnp.max(logits, axis=0, keepdims=True)                              # (1, 1)
    p = jnp.exp(logits - m)                                                 # (S, 1)
    denom = jnp.sum(p, axis=0, keepdims=True)                               # (1, 1)
    # Reciprocal-multiply instead of a VALU divide; approx=False for accuracy.
    attn_ref[...] = p * pl.reciprocal(denom, approx=False)


def mem_attention_weights(key_vec, keys):
    """key_vec: (1, K), keys: (S, K) -> attn (S, 1) float32."""
    S, K = keys.shape
    vmem_cap = _vmem_capacity_bytes()
    # TODO(synk): for very large `size` this single-block softmax would need an
    # S-tiled two-pass (logits, then normalize); unnecessary at module-typical sizes.
    assert 2 * S * K * 4 <= vmem_cap * 3 // 4, "keys too large for single-block softmax pass"
    needed = 4 * S * K * 4 + (8 << 20)
    return pl.pallas_call(
        mem_attn_weights_kernel,
        out_shape=jax.ShapeDtypeStruct((S, 1), jnp.float32),
        compiler_params=pltpu.CompilerParams(
            vmem_limit_bytes=int(min(vmem_cap * 3 // 4, max(32 << 20, needed))),
        ),
        cost_estimate=pl.CostEstimate(
            flops=2 * S * K + 4 * S,
            transcendentals=S,
            bytes_accessed=4 * (S * K + K + 2 * S),
        ),
    )(key_vec, keys)


# -----------------------------------------------------------------------------
# Pass 2: streaming weighted value sum  out[r, :] = sum_s attn[s] * values[s, r, :]
# -----------------------------------------------------------------------------
def mem_wsum_kernel(attn_ref, values_ref, out_ref):
    """attn_ref: (tS, 1); values_ref: (tS, tR, 128); out_ref: (tR, 128) resident over S."""
    s = pl.program_id(1)

    @pl.when(s == 0)
    def _init():
        out_ref[...] = jnp.zeros_like(out_ref)

    w = attn_ref[...]                                               # (tS, 1)
    # (tS, tR, 128) * (tS, 1, 1), reduce over S: plain cross-vreg VALU adds,
    # lane- and sublane-dense output tile -> unmasked full-width stores.
    out_ref[...] += jnp.sum(values_ref[...] * w[:, :, None], axis=0)


def _choose_tiles(S, R, vmem_cap):
    """Pick (tS, tR): tS divides S exactly; tR is a multiple of 8 dividing R, sized so
    one values block stays within ~vmem_cap/8 (double-buffered by the pipeline) and
    capped at R//2 so the 'parallel' output axis has >= 2 tiles for megacore."""
    if S <= 512:
        t_s = S
    else:
        t_s = next((c for c in (512, 256, 128, 64, 32, 16, 8) if S % c == 0), S)

    budget = max(512 * 1024, vmem_cap // 8)              # per values block (x2 buffers)
    max_tr = max(8, (budget // (t_s * 128 * 4)) // 8 * 8)
    if R >= 16:
        max_tr = min(max_tr, R // 2)                     # >= 2 output tiles -> both TCs busy
    start = min(R, max_tr)
    start -= start % 8
    t_r = None
    for cand in range(start, 7, -8):
        if R % cand == 0:
            t_r = cand
            break
    if t_r is None:
        t_r = R                                          # fallback: full-dim block
    return t_s, t_r


def mem_weighted_sum(attn, values3):
    """attn: (S, 1), values3: (S, R, 128) -> (R, 128) float32."""
    S, R, L = values3.shape
    assert L == 128 and attn.shape == (S, 1)
    vmem_cap = _vmem_capacity_bytes()
    t_s, t_r = _choose_tiles(S, R, vmem_cap)
    assert S % t_s == 0 and R % t_r == 0, "tiles must divide exactly (no masking in kernel)"
    grid = (R // t_r, S // t_s)          # (output rows "parallel", S reduction "arbitrary")

    values_block = t_s * t_r * 128 * 4
    attn_block = max(t_s, 8) * 128 * 4   # padded (tS, 1) tile
    out_block = t_r * 128 * 4
    needed = 2 * (values_block + attn_block + out_block) + (8 << 20)
    vmem_limit = int(min(vmem_cap * 3 // 4, max(32 << 20, needed)))

    cost = pl.CostEstimate(
        flops=2 * S * R * 128,
        transcendentals=0,
        bytes_accessed=4 * (S * R * 128 + R * 128 + (R // t_r) * S),  # attn re-fetch per R tile
    )

    return pl.pallas_call(
        mem_wsum_kernel,
        out_shape=jax.ShapeDtypeStruct((R, 128), jnp.float32),
        grid_spec=pltpu.PrefetchScalarGridSpec(
            num_scalar_prefetch=0,
            grid=grid,
            in_specs=[
                pl.BlockSpec((t_s, 1), lambda r, s: (s, 0)),            # attention weights
                pl.BlockSpec((t_s, t_r, 128), lambda r, s: (s, r, 0)),  # values tile
            ],
            out_specs=pl.BlockSpec((t_r, 128), lambda r, s: (r, 0)),
        ),
        compiler_params=pltpu.CompilerParams(
            dimension_semantics=("parallel", "arbitrary"),
            vmem_limit_bytes=vmem_limit,
        ),
        cost_estimate=cost,
    )(attn, values3)


# -----------------------------------------------------------------------------
# Wrapper (Mem.forward) + pure-JAX reference
# -----------------------------------------------------------------------------
def nearest_resize_nchw(x, out_h, out_w):
    """PyTorch F.interpolate(mode='nearest'): src = floor(dst * in / out)."""
    _, _, H, W = x.shape
    ih = jnp.floor(jnp.arange(out_h) * (H / out_h)).astype(jnp.int32)
    iw = jnp.floor(jnp.arange(out_w) * (W / out_w)).astype(jnp.int32)
    return x[:, :, ih, :][:, :, :, iw]


def mem_forward(params, x):
    keys, values = params["keys"], params["values"]
    S, K = keys.shape
    O = values.shape[1]
    # TODO(synk): the nearest resize is a 12 KiB static index gather left to XLA;
    # an in-kernel gather/upsample for arbitrary H,W has no clean lane-safe Pallas form.
    key_vec = nearest_resize_nchw(x, 32, 32).reshape(1, -1).astype(jnp.float32)
    assert key_vec.shape[1] == K, "keysize must equal batch*C*32*32 (batch must be 1)"
    assert O % 128 == 0, "outputsize must be a multiple of 128 (it is 3*128*128)"
    attn = mem_attention_weights(key_vec, keys)        # (S, 1)  -- softmax weights, once
    values3 = values.reshape(S, O // 128, 128)         # free row-major reshape
    out = mem_weighted_sum(attn, values3)              # (O//128, 128) lane/sublane dense
    return out.reshape(1, 3, 128, 128)


def mem_forward_ref(params, x):
    """Pure-JAX reference of Mem.forward (for correctness check)."""
    key = nearest_resize_nchw(x, 32, 32).reshape(-1)
    logits = params["keys"] @ key
    attn = jax.nn.softmax(logits, axis=0)
    value = jnp.sum(params["values"] * attn[:, None], axis=0)
    return value.reshape(1, 3, 128, 128)


if __name__ == "__main__":
    rng = jax.random.PRNGKey(0)
    k_keys, k_vals, k_x = jax.random.split(rng, 3)

    size = 8                      # memory slots (module `size` arg)
    keysize = 3 * 32 * 32         # 3072  - forced by key.flatten() with batch=1, C=3
    outputsize = 3 * 128 * 128    # 49152 - forced by reshape to (1, 3, 128, 128)

    params = {
        # torch.randn -> standard normal
        "keys": jax.random.normal(k_keys, (size, keysize), jnp.float32),
        "values": jax.random.normal(k_vals, (size, outputsize), jnp.float32),
    }
    x = jax.random.normal(k_x, (1, 3, 16, 16), jnp.float32)   # NCHW, batch must be 1

    out = jax.block_until_ready(jax.jit(mem_forward)(params, x))
    assert out.shape == (1, 3, 128, 128) and out.dtype == jnp.float32

    ref = jax.block_until_ready(jax.jit(mem_forward_ref)(params, x))
    err = float(jnp.max(jnp.abs(out - ref)))
    assert err < 1e-4, f"max abs error vs reference: {err}"
    print("KERNEL_OK")
</pallas_src>

<mosaic_0001>
module attributes {stable_mosaic.version = 11 : i64} {
  func.func @mem_attn_weights_kernel(%arg0: memref<1x3072xf32, #tpu.memory_space<vmem>>, %arg1: memref<8x3072xf32, #tpu.memory_space<vmem>>, %arg2: memref<8x1xf32, #tpu.memory_space<vmem>>) attributes {dimension_semantics = [], scalar_prefetch = 0 : i64, scratch_operands = 0 : i64, tpu.core_type = #tpu.core_type<tc>} {
    %c0 = arith.constant 0 : index
    %c0_0 = arith.constant 0 : index
    %0 = vector.load %arg1[%c0, %c0_0] : memref<8x3072xf32, #tpu.memory_space<vmem>>, vector<8x3072xf32>
    %c0_1 = arith.constant 0 : index
    %c0_2 = arith.constant 0 : index
    %1 = vector.load %arg0[%c0_1, %c0_2] : memref<1x3072xf32, #tpu.memory_space<vmem>>, vector<1x3072xf32>
    %2 = vector.broadcast %1 : vector<1x3072xf32> to vector<8x3072xf32>
    %3 = arith.mulf %0, %2 : vector<8x3072xf32>
    %cst = arith.constant dense<0.000000e+00> : vector<8xf32>
    %4 = vector.multi_reduction <add>, %3, %cst [1] : vector<8x3072xf32> to vector<8xf32>
    %5 = vector.shape_cast %4 : vector<8xf32> to vector<8x1xf32>
    %cst_3 = arith.constant dense<0xFF800000> : vector<1xf32>
    %6 = vector.multi_reduction <maximumf>, %5, %cst_3 [0] : vector<8x1xf32> to vector<1xf32>
    %7 = vector.shape_cast %6 : vector<1xf32> to vector<1x1xf32>
    %8 = vector.broadcast %7 : vector<1x1xf32> to vector<8x1xf32>
    %9 = arith.subf %5, %8 : vector<8x1xf32>
    %10 = math.exp %9 : vector<8x1xf32>
    %cst_4 = arith.constant dense<0.000000e+00> : vector<1xf32>
    %11 = vector.multi_reduction <add>, %10, %cst_4 [0] : vector<8x1xf32> to vector<1xf32>
    %12 = vector.shape_cast %11 : vector<1xf32> to vector<1x1xf32>
    %13 = tpu.reciprocal %12 : vector<1x1xf32> -> vector<1x1xf32>
    %14 = vector.broadcast %13 : vector<1x1xf32> to vector<8x1xf32>
    %15 = arith.mulf %10, %14 : vector<8x1xf32>
    %c0_5 = arith.constant 0 : index
    %c0_6 = arith.constant 0 : index
    %16 = vector.load %arg2[%c0_5, %c0_6] : memref<8x1xf32, #tpu.memory_space<vmem>>, vector<8x1xf32>
    tpu.vector_store %arg2[%c0_5, %c0_6], %15 {strides = array<i32>} : memref<8x1xf32, #tpu.memory_space<vmem>>, vector<8x1xf32>,
    return
  }
}

module attributes {stable_mosaic.version = 11 : i64} {
  func.func @mem_wsum_kernel(%arg0: i32, %arg1: i32, %arg2: memref<8x1xf32, #tpu.memory_space<vmem>>, %arg3: memref<8x192x128xf32, #tpu.memory_space<vmem>>, %arg4: memref<192x128xf32, #tpu.memory_space<vmem>>) attributes {dimension_semantics = [#tpu.dimension_semantics<parallel>, #tpu.dimension_semantics<arbitrary>], iteration_bounds = array<i64: 2, 1>, scalar_prefetch = 0 : i64, scratch_operands = 0 : i64, tpu.core_type = #tpu.core_type<tc>, window_params = [{transform_indices = @transform_0, window_bounds = array<i64: 8, 1>}, {transform_indices = @transform_1, window_bounds = array<i64: 8, 192, 128>}, {transform_indices = @transform_2, window_bounds = array<i64: 192, 128>}]} {
    %c0_i32 = arith.constant 0 : i32
    %0 = arith.cmpi eq, %arg1, %c0_i32 : i32
    %1 = arith.extui %0 : i1 to i32
    %c0_i32_0 = arith.constant 0 : i32
    %2 = arith.cmpi ne, %1, %c0_i32_0 : i32
    scf.if %2 {
      %cst_9 = arith.constant 0.000000e+00 : f32
      %12 = vector.broadcast %cst_9 : f32 to vector<192x128xf32>
      %c0_10 = arith.constant 0 : index
      %c0_11 = arith.constant 0 : index
      %13 = vector.load %arg4[%c0_10, %c0_11] : memref<192x128xf32, #tpu.memory_space<vmem>>, vector<192x128xf32>
      tpu.vector_store %arg4[%c0_10, %c0_11], %12 {strides = array<i32>} : memref<192x128xf32, #tpu.memory_space<vmem>>, vector<192x128xf32>,
    } else {
    }
    %c0 = arith.constant 0 : index
    %c0_1 = arith.constant 0 : index
    %3 = vector.load %arg2[%c0, %c0_1] : memref<8x1xf32, #tpu.memory_space<vmem>>, vector<8x1xf32>
    %c0_2 = arith.constant 0 : index
    %c0_3 = arith.constant 0 : index
    %4 = vector.load %arg4[%c0_2, %c0_3] : memref<192x128xf32, #tpu.memory_space<vmem>>, vector<192x128xf32>
    %c0_4 = arith.constant 0 : index
    %c0_5 = arith.constant 0 : index
    %c0_6 = arith.constant 0 : index
    %5 = vector.load %arg3[%c0_4, %c0_5, %c0_6] : memref<8x192x128xf32, #tpu.memory_space<vmem>>, vector<8x192x128xf32>
    %6 = vector.shape_cast %3 : vector<8x1xf32> to vector<8x1x1xf32>
    %7 = vector.broadcast %6 : vector<8x1x1xf32> to vector<8x192x128xf32>
    %8 = arith.mulf %5, %7 : vector<8x192x128xf32>
    %cst = arith.constant dense<0.000000e+00> : vector<192x128xf32>
    %9 = vector.multi_reduction <add>, %8, %cst [0] : vector<8x192x128xf32> to vector<192x128xf32>
    %10 = arith.addf %4, %9 : vector<192x128xf32>
    %c0_7 = arith.constant 0 : index
    %c0_8 = arith.constant 0 : index
    %11 = vector.load %arg4[%c0_7, %c0_8] : memref<192x128xf32, #tpu.memory_space<vmem>>, vector<192x128xf32>
    tpu.vector_store %arg4[%c0_7, %c0_8], %10 {strides = array<i32>} : memref<192x128xf32, #tpu.memory_space<vmem>>, vector<192x128xf32>,
    return
  }
  func.func @transform_0(%arg0: i32, %arg1: i32) -> (i32, i32) {
    %c0_i32 = arith.constant 0 : i32
    %c0_i32_0 = arith.constant 0 : i32
    return %arg1, %c0_i32 : i32, i32
  }
  func.func @transform_1(%arg0: i32, %arg1: i32) -> (i32, i32, i32) {
    %c0_i32 = arith.constant 0 : i32
    %c0_i32_0 = arith.constant 0 : i32
    return %arg1, %arg0, %c0_i32 : i32, i32, i32
  }
  func.func @transform_2(%arg0: i32, %arg1: i32) -> (i32, i32) {
    %c0_i32 = arith.constant 0 : i32
    %c0_i32_0 = arith.constant 0 : i32
    return %arg0, %c0_i32 : i32, i32
  }
}

</mosaic_0001>

<llo_original>
// kernel: mem_forward.2
$region0: #{mem_forward.2}
  #allocation0 [shape = 'u32[]', space=smem, size = 0x4, offset = 0x4, fixed_abs, tag = 'smem constant byte address 0x4 - core index']
  #allocation1 [shape = 'u32[144,128]{1,0:T(1,128)}', space=vmem, size = 0x12000, scoped, tag = 'internal scratch']
  %s0 = inlined_call_operand.vmem [shape: f32[1,3072], index: 0, kind: input, shape index: {}]
  %s1 = inlined_call_operand.hbm [shape: f32[8,3072], index: 1, kind: input, shape index: {}]
  %s2 = inlined_call_operand.vmem [shape: f32[8,1], index: 2, kind: output, shape index: {}]
  %s3 = sld [smem:[#allocation0]]
  $region22: #{mem_forward.2} parent=0
    _
  %s5 = ssub.s32 1, %s3
  %s6 = scalar_select 0, %s5, %s3
  $region1: #{mem_forward.2} parent=0
    #allocation2 [shape = 'u8[98304]{0}', space=vmem, size = 0x18000, scoped, tag = 'input window, operand 1, single buffered']
    #allocation3 [shape = 's32[1]{0}', space=sflag, size = 0x4, scoped, tag = 'scoped memory for mem_forward.2']
    %7 = vsyncpa [#allocation3], 0
    // Predicated region
    $region2: #{mem_forward.2} parent=1 // pred_check
      _
    $region3: #{mem_forward.2} parent=1 // pred_check_branch
      %9 = sbr.rel (0) target = $region5
    $region4: #{mem_forward.2} parent=1 // pred_region
      _
    $region5: #{mem_forward.2} parent=1 // pred_fallthru
      _
    // Predicated region
    $region6: #{mem_forward.2} parent=1 // pred_check
      _
    $region7: #{mem_forward.2} parent=1 // pred_check_branch
      %11 = sbr.rel (0) target = $region9
    $region8: #{mem_forward.2} parent=1 // pred_region
      %s13 = ssub.s32 3072, 3072
      %14 = vsyncadd [#allocation3], %s13
      %s16 = sshll.u32 [#allocation2], 4
      %s17 = int_to_ptr.vmem [resolvable:$true] %s16
      %19 = dma.hbm_to_vmem [thread:$0]  %s1, 3072, %s17, [#allocation3]
    $region9: #{mem_forward.2} parent=1 // pred_fallthru
      _
    // Predicated region
    $region10: #{mem_forward.2} parent=1 // pred_check
      _
    $region11: #{mem_forward.2} parent=1 // pred_check_branch
      %21 = sbr.rel (0) target = $region13
    $region12: #{mem_forward.2} parent=1 // pred_region
      %22 = dma.done [#allocation3], 3072
    $region13: #{mem_forward.2} parent=1 // pred_fallthru
      _
    %v23 = vld [vmem:[#allocation2] sm:$0xff]
    %v24 = vld [vmem:[#allocation2 + $0x8] sm:$0xff]
    %v25 = vld [vmem:[#allocation2 + $0x10] sm:$0xff]
    %v26 = vld [vmem:[#allocation2 + $0x18] sm:$0xff]
    %v27 = vld [vmem:[#allocation2 + $0x20] sm:$0xff]
    %v28 = vld [vmem:[#allocation2 + $0x28] sm:$0xff]
    %v29 = vld [vmem:[#allocation2 + $0x30] sm:$0xff]
    %v30 = vld [vmem:[#allocation2 + $0x38] sm:$0xff]
    %v31 = vld [vmem:[#allocation2 + $0x40] sm:$0xff]
    %v32 = vld [vmem:[#allocation2 + $0x48] sm:$0xff]
    %v33 = vld [vmem:[#allocation2 + $0x50] sm:$0xff]
    %v34 = vld [vmem:[#allocation2 + $0x58] sm:$0xff]
    %v35 = vld [vmem:[#allocation2 + $0x60] sm:$0xff]
    %v36 = vld [vmem:[#allocation2 + $0x68] sm:$0xff]
    %v37 = vld [vmem:[#allocation2 + $0x70] sm:$0xff]
    %v38 = vld [vmem:[#allocation2 + $0x78] sm:$0xff]
    %v39 = vld [vmem:[#allocation2 + $0x80] sm:$0xff]
    %v40 = vld [vmem:[#allocation2 + $0x88] sm:$0xff]
    %v41 = vld [vmem:[#allocation2 + $0x90] sm:$0xff]
    %v42 = vld [vmem:[#allocation2 + $0x98] sm:$0xff]
    %v43 = vld [vmem:[#allocation2 + $0xa0] sm:$0xff]
    %v44 = vld [vmem:[#allocation2 + $0xa8] sm:$0xff]
    %v45 = vld [vmem:[#allocation2 + $0xb0] sm:$0xff]
    %v46 = vld [vmem:[#allocation2 + $0xb8] sm:$0xff]
    %v47 = vld [vmem:[%s0] sm:$0xff]
    %v48 = vld [vmem:[%s0 + $0x8] sm:$0xff]
    %v49 = vld [vmem:[%s0 + $0x10] sm:$0xff]
    %v53 = vlaneseq
    %v54 = vshrl.u32 %v53, 7
    %v55 = vsub.s32 0, %v54
    %v56 = vrot.slane %v47, %v55
    %v57 = vlaneseq
    %v58 = vshrl.u32 %v57, 7
    %v59 = vsub.s32 1, %v58
    %v60 = vrot.slane %v47, %v59
    %v61 = vlaneseq
    %v62 = vshrl.u32 %v61, 7
    %v63 = vsub.s32 2, %v62
    %v64 = vrot.slane %v47, %v63
    %v65 = vlaneseq
    %v66 = vshrl.u32 %v65, 7
    %v67 = vsub.s32 3, %v66
    %v68 = vrot.slane %v47, %v67
    %v69 = vlaneseq
    %v70 = vshrl.u32 %v69, 7
    %v71 = vsub.s32 4, %v70
    %v72 = vrot.slane %v47, %v71
    %v73 = vlaneseq
    %v74 = vshrl.u32 %v73, 7
    %v75 = vsub.s32 5, %v74
    %v76 = vrot.slane %v47, %v75
    %v77 = vlaneseq
    %v78 = vshrl.u32 %v77, 7
    %v79 = vsub.s32 6, %v78
    %v80 = vrot.slane %v47, %v79
    %v81 = vlaneseq
    %v82 = vshrl.u32 %v81, 7
    %v83 = vsub.s32 7, %v82
    %v84 = vrot.slane %v47, %v83
    %v85 = vlaneseq
    %v86 = vshrl.u32 %v85, 7
    %v87 = vsub.s32 0, %v86
    %v88 = vrot.slane %v48, %v87
    %v89 = vlaneseq
    %v90 = vshrl.u32 %v89, 7
    %v91 = vsub.s32 1, %v90
    %v92 = vrot.slane %v48, %v91
    %v93 = vlaneseq
    %v94 = vshrl.u32 %v93, 7
    %v95 = vsub.s32 2, %v94
    %v96 = vrot.slane %v48, %v95
    %v97 = vlaneseq
    %v98 = vshrl.u32 %v97, 7
    %v99 = vsub.s32 3, %v98
    %v100 = vrot.slane %v48, %v99
    %v101 = vlaneseq
    %v102 = vshrl.u32 %v101, 7
    %v103 = vsub.s32 4, %v102
    %v104 = vrot.slane %v48, %v103
    %v105 = vlaneseq
    %v106 = vshrl.u32 %v105, 7
    %v107 = vsub.s32 5, %v106
    %v108 = vrot.slane %v48, %v107
    %v109 = vlaneseq
    %v110 = vshrl.u32 %v109, 7
    %v111 = vsub.s32 6, %v110
    %v112 = vrot.slane %v48, %v111
    %v113 = vlaneseq
    %v114 = vshrl.u32 %v113, 7
    %v115 = vsub.s32 7, %v114
    %v116 = vrot.slane %v48, %v115
    %v117 = vlaneseq
    %v118 = vshrl.u32 %v117, 7
    %v119 = vsub.s32 0, %v118
    %v120 = vrot.slane %v49, %v119
    %v121 = vlaneseq
    %v122 = vshrl.u32 %v121, 7
    %v123 = vsub.s32 1, %v122
    %v124 = vrot.slane %v49, %v123
    %v125 = vlaneseq
    %v126 = vshrl.u32 %v125, 7
    %v127 = vsub.s32 2, %v126
    %v128 = vrot.slane %v49, %v127
    %v129 = vlaneseq
    %v130 = vshrl.u32 %v129, 7
    %v131 = vsub.s32 3, %v130
    %v132 = vrot.slane %v49, %v131
    %v133 = vlaneseq
    %v134 = vshrl.u32 %v133, 7
    %v135 = vsub.s32 4, %v134
    %v136 = vrot.slane %v49, %v135
    %v137 = vlaneseq
    %v138 = vshrl.u32 %v137, 7
    %v139 = vsub.s32 5, %v138
    %v140 = vrot.slane %v49, %v139
    %v141 = vlaneseq
    %v142 = vshrl.u32 %v141, 7
    %v143 = vsub.s32 6, %v142
    %v144 = vrot.slane %v49, %v143
    %v145 = vlaneseq
    %v146 = vshrl.u32 %v145, 7
    %v147 = vsub.s32 7, %v146
    %v148 = vrot.slane %v49, %v147
    %v173 = vmul.f32 %v23, %v56
    %v174 = vmul.f32 %v24, %v60
    %v175 = vmul.f32 %v25, %v64
    %v176 = vmul.f32 %v26, %v68
    %v177 = vmul.f32 %v27, %v72
    %v178 = vmul.f32 %v28, %v76
    %v179 = vmul.f32 %v29, %v80
    %v180 = vmul.f32 %v30, %v84
    %v181 = vmul.f32 %v31, %v88
    %v182 = vmul.f32 %v32, %v92
    %v183 = vmul.f32 %v33, %v96
    %v184 = vmul.f32 %v34, %v100
    %v185 = vmul.f32 %v35, %v104
    %v186 = vmul.f32 %v36, %v108
    %v187 = vmul.f32 %v37, %v112
    %v188 = vmul.f32 %v38, %v116
    %v189 = vmul.f32 %v39, %v120
    %v190 = vmul.f32 %v40, %v124
    %v191 = vmul.f32 %v41, %v128
    %v192 = vmul.f32 %v42, %v132
    %v193 = vmul.f32 %v43, %v136
    %v194 = vmul.f32 %v44, %v140
    %v195 = vmul.f32 %v45, %v144
    %v196 = vmul.f32 %v46, %v148
    %v197 = vadd.f32 %v173, %v174
    %v198 = vadd.f32 %v197, %v175
    %v199 = vadd.f32 %v198, %v176
    %v200 = vadd.f32 %v199, %v177
    %v201 = vadd.f32 %v200, %v178
    %v202 = vadd.f32 %v201, %v179
    %v203 = vadd.f32 %v202, %v180
    %v204 = vadd.f32 %v203, %v181
    %v205 = vadd.f32 %v204, %v182
    %v206 = vadd.f32 %v205, %v183
    %v207 = vadd.f32 %v206, %v184
    %v208 = vadd.f32 %v207, %v185
    %v209 = vadd.f32 %v208, %v186
    %v210 = vadd.f32 %v209, %v187
    %v211 = vadd.f32 %v210, %v188
    %v212 = vadd.f32 %v211, %v189
    %v213 = vadd.f32 %v212, %v190
    %v214 = vadd.f32 %v213, %v191
    %v215 = vadd.f32 %v214, %v192
    %v216 = vadd.f32 %v215, %v193
    %v217 = vadd.f32 %v216, %v194
    %v218 = vadd.f32 %v217, %v195
    %v219 = vadd.f32 %v218, %v196
    %220 = vadd.xlane.f32.xlu0 %v219
    %v221 = vpop.xlane.xlu0 %220
    %v222 = vrot.slane %v221, 4
    %v223 = vmax.f32 %v221, %v222
    %v224 = vrot.slane %v223, 2
    %v225 = vmax.f32 %v223, %v224
    %v226 = vrot.slane %v225, 1
    %v227 = vmax.f32 %v225, %v226
    %v228 = vsub.f32 %v221, %v227
    %v229 = vmul.f32 %v228, 1.442695
    %v230 = vpow.pop %v229
    %v231 = vrot.slane %v230, 4
    %v232 = vadd.f32 %v230, %v231
    %v233 = vrot.slane %v232, 2
    %v234 = vadd.f32 %v232, %v233
    %v235 = vrot.slane %v234, 1
    %v236 = vadd.f32 %v234, %v235
    %v237 = vrcp.pop %v236
    %v238 = vmul.f32 %v230, %v237
    %vm239 = vcmask 7168
    %240 = vst.msk [vmem:[%s2] sm:$0xff] %vm239, %v238
    // Predicated region
    $region14: #{mem_forward.2} parent=1 // pred_check
      _
    $region15: #{mem_forward.2} parent=1 // pred_check_branch
      %242 = sbr.rel (0) target = $region17
    $region16: #{mem_forward.2} parent=1 // pred_region
      _
    $region17: #{mem_forward.2} parent=1 // pred_fallthru
      _
    // Predicated region
    $region18: #{mem_forward.2} parent=1 // pred_check
      _
    $region19: #{mem_forward.2} parent=1 // pred_check_branch
      %244 = sbr.rel (0) target = $region21
    $region20: #{mem_forward.2} parent=1 // pred_region
      _
    $region21: #{mem_forward.2} parent=1 // pred_fallthru
      _
    %245 = vsyncpa [#allocation3], 1

// kernel: mem_forward.3
$region0: #{mem_forward.3}
  #allocation0 [shape = 'u32[]', space=smem, size = 0x4, offset = 0x4, fixed_abs, tag = 'smem constant byte address 0x4 - core index']
  #allocation1 [shape = 'u32[144,128]{1,0:T(1,128)}', space=vmem, size = 0x12000, scoped, tag = 'internal scratch']
  %s0 = inlined_call_operand.vmem [shape: f32[8,1], index: 0, kind: input, shape index: {}]
  %s1 = inlined_call_operand.vmem [shape: f32[8,384,128], index: 1, kind: input, shape index: {}]
  %s2 = inlined_call_operand.hbm [shape: f32[384,128], index: 2, kind: output, shape index: {}]
  %s3 = sld [smem:[#allocation0]]
  $region83: #{mem_forward.3} parent=0
    _
  %s5 = ssub.s32 1, %s3
  %s6 = scalar_select 0, %s5, %s3
  $region1: #{mem_forward.3} parent=0
    #allocation2 [shape = 'u8[1572864]{0}', space=vmem, size = 0x180000, scoped, tag = 'input window, operand 1']
    #allocation3 [shape = 'u8[196608]{0}', space=vmem, size = 0x30000, scoped, tag = 'output window, operand 0']
    #allocation4 [shape = 's32[2]{0}', space=sflag, size = 0x8, scoped, tag = 'scoped memory for mem_forward.3']
    %7 = vsyncpa [#allocation4], 0
    %s8 = scalar_lea.sflag [#allocation4], 1
    %9 = vsyncpa %s8, 0
    loop: start=0, step=1, limit=4
    $region2: #{mem_forward.3} parent=1 // loop_pre_header
      _
    $region3: #{mem_forward.3} parent=1 // loop_header
      %s11 = sphi 0, %s15
      %p12 = scmp.ge.s32.totalorder %s11, 4
      %s18 = sphi 0, %s30
      %s19 = sphi 0, %s26
      %s20 = sphi 0, %s18
      %s21 = sphi 0, %s19
      %s22 = sphi 0, %s20
      %s23 = sphi 0, %s21
      %s33 = sphi 0, %s35
      %s36 = sphi 0, %s33
      %s37 = sphi 0, %s36
      %s53 = sphi 0, %s37
      %s61 = sphi 0, %s63
      %s64 = sphi 0, %s61
      %s65 = sphi 0, %s64
      %s81 = sphi 0, %s65
      %s87 = sphi 0, %s89
      %s90 = sphi 0, %s87
      %s91 = sphi 0, %s90
      %s107 = sphi 0, %s91
    $region4: #{mem_forward.3} parent=1 // loop_header_branch
      %14 = sbr.rel (%p12) target = $region8
    $region5: #{mem_forward.3} parent=1 // loop_body
      %s16 = ssub.s32 %s11, 1
      %s17 = ssub.s32 %s11, 2
      %s24 = sadd.s32 1, %s19
      %p25 = scmp.ge.s32.totalorder %s24, 1
      %s26 = scalar_select %p25, 0, %s24
      %s27 = sadd.s32 1, %s18
      %s28 = scalar_select %p25, %s27, %s18
      %p29 = scmp.ge.s32.totalorder %s28, 2
      %s30 = scalar_select %p29, 0, %s28
      %s31 = ssub.s32 %s19, %s26
      %p32 = scmp.eq.s32.totalorder %s31, 0
      %s34 = sadd.s32 %s33, 1
      %s35 = scalar_select %p32, %s33, %s34
      %p38 = pneg %p32
      %p39 = scmp.eq.s32.totalorder %s11, 1
      %p40 = por %p38, %p39
      %p41 = scmp.ne.s32.totalorder %s33, %s36
      %p42 = scmp.eq.s32.totalorder %s11, 0
      %p43 = por %p41, %p42
      %p44 = scmp.ne.s32.totalorder %s33, %s36
      %p45 = scmp.eq.s32.totalorder %s16, 1
      %p46 = por %p44, %p45
      %p47 = scmp.ne.s32.totalorder %s36, %s37
      %p48 = scmp.eq.s32.totalorder %s16, 0
      %p49 = por %p47, %p48
      %p50 = scmp.ne.s32.totalorder %s36, %s37
      %p51 = scmp.eq.s32.totalorder %s17, 1
      %p52 = por %p50, %p51
      %p54 = scmp.ne.s32.totalorder %s37, %s53
      %p55 = scmp.eq.s32.totalorder %s17, 0
      %p56 = por %p54, %p55
      %s57 = ssub.s32 %s19, %s26
      %s58 = ssub.s32 %s18, %s30
      %s59 = sor.u32 %s57, %s58
      %p60 = scmp.eq.s32.totalorder %s59, 0
      %s62 = sadd.s32 %s61, 1
      %s63 = scalar_select %p60, %s61, %s62
      %p66 = pneg %p60
      %p67 = scmp.eq.s32.totalorder %s11, 1
      %p68 = por %p66, %p67
      %p69 = scmp.ne.s32.totalorder %s61, %s64
      %p70 = scmp.eq.s32.totalorder %s11, 0
      %p71 = por %p69, %p70
      %p72 = scmp.ne.s32.totalorder %s61, %s64
      %p73 = scmp.eq.s32.totalorder %s16, 1
      %p74 = por %p72, %p73
      %p75 = scmp.ne.s32.totalorder %s64, %s65
      %p76 = scmp.eq.s32.totalorder %s16, 0
      %p77 = por %p75, %p76
      %p78 = scmp.ne.s32.totalorder %s64, %s65
      %p79 = scmp.eq.s32.totalorder %s17, 1
      %p80 = por %p78, %p79
      %p82 = scmp.ne.s32.totalorder %s65, %s81
      %p83 = scmp.eq.s32.totalorder %s17, 0
      %p84 = por %p82, %p83
      %s85 = ssub.s32 %s18, %s30
      %p86 = scmp.eq.s32.totalorder %s85, 0
      %s88 = sadd.s32 %s87, 1
      %s89 = scalar_select %p86, %s87, %s88
      %p92 = pneg %p86
      %p93 = scmp.eq.s32.totalorder %s11, 1
      %p94 = por %p92, %p93
      %p95 = scmp.ne.s32.totalorder %s87, %s90
      %p96 = scmp.eq.s32.totalorder %s11, 0
      %p97 = por %p95, %p96
      %p98 = scmp.ne.s32.totalorder %s87, %s90
      %p99 = scmp.eq.s32.totalorder %s16, 1
      %p100 = por %p98, %p99
      %p101 = scmp.ne.s32.totalorder %s90, %s91
      %p102 = scmp.eq.s32.totalorder %s16, 0
      %p103 = por %p101, %p102
      %p104 = scmp.ne.s32.totalorder %s90, %s91
      %p105 = scmp.eq.s32.totalorder %s17, 1
      %p106 = por %p104, %p105
      %p108 = scmp.ne.s32.totalorder %s91, %s107
      %p109 = scmp.eq.s32.totalorder %s17, 0
      %p110 = por %p108, %p109
      %p111 = scmp.le.s32.totalorder 1, %s11
      %p112 = scmp.lt.s32.totalorder %s11, 3
      %p113 = pnand %p111, %p112
      %p114 = pneg %p113
      // Predicated region
      $region9: #{mem_forward.3} parent=5 // pred_check
        _
      $region10: #{mem_forward.3} parent=5 // pred_check_branch
        %116 = sbr.rel (%p113) target = $region12
      $region11: #{mem_forward.3} parent=5 // pred_region
        %s117 = ssub.s32 %s11, 1
        // Predicated region
        $region13: #{mem_forward.3} parent=11 // pred_check
          %p118 = pneg %p49
        $region14: #{mem_forward.3} parent=11 // pred_check_branch
          %120 = sbr.rel (%p118) target = $region16
        $region15: #{mem_forward.3} parent=11 // pred_region
          %p121 = scmp.lt.s32.totalorder %s21, 0
          %s122 = scalar_select %p121, %s21, 0
          %s123 = smul.addr %s122, 8
          %s124 = scalar_lea.vmem %s0, %s123
        $region16: #{mem_forward.3} parent=11 // pred_fallthru
          _
      $region12: #{mem_forward.3} parent=5 // pred_fallthru
        _
      %p125 = scmp.lt.s32.totalorder %s11, 2
      // Predicated region
      $region17: #{mem_forward.3} parent=5 // pred_check
        %p126 = pneg %p125
      $region18: #{mem_forward.3} parent=5 // pred_check_branch
        %128 = sbr.rel (%p126) target = $region20
      $region19: #{mem_forward.3} parent=5 // pred_region
        // Predicated region
        $region21: #{mem_forward.3} parent=19 // pred_check
          %p129 = pneg %p71
        $region22: #{mem_forward.3} parent=19 // pred_check_branch
          %131 = sbr.rel (%p129) target = $region24
        $region23: #{mem_forward.3} parent=19 // pred_region
          %s132 = sand.u32 %s61, 1
          %s133 = sand.u32 %s61, 1
          %s134 = smul.addr %s133, 1536
          %s135 = scalar_lea.vmem [#allocation2], %s134
          %s136 = smul.u32 8, %s19
          %s137 = smul.u32 24, %s18
          %s138 = smul.addr %s136, 48
          %s139 = sadd.s32 %s137, %s138
          %s140 = smul.addr %s139, 8
          %s141 = scalar_lea.vmem %s1, %s140
          // Predicated region
          $region25: #{mem_forward.3} parent=23 // pred_check
            _
          $region26: #{mem_forward.3} parent=23 // pred_check_branch
            %143 = sbr.rel (0) target = $region28
          $region27: #{mem_forward.3} parent=23 // pred_region
            // Predicated region
            $region29: #{mem_forward.3} parent=27 // pred_check
              _
            $region30: #{mem_forward.3} parent=27 // pred_check_branch
              %145 = sbr.rel (0) target = $region32
            $region31: #{mem_forward.3} parent=27 // pred_region
              // Predicated region
              $region44: #{mem_forward.3} parent=31 // pred_check
                _
              $region45: #{mem_forward.3} parent=31 // pred_check_branch
                %542 = sbr.rel (0) target = $region47
              $region46: #{mem_forward.3} parent=31 // pred_region
                loop: start=0, step=1, limit=1
                $region48: #{mem_forward.3} parent=46 // loop_pre_header
                  _
                $region49: #{mem_forward.3} parent=46 // loop_header
                  %s544 = sphi 0, %s548
                  %p545 = scmp.ge.s32.totalorder %s544, 1
                  %s549 = sphi %s141, %s141
                  %s550 = sphi %s135, %s135
                $region50: #{mem_forward.3} parent=46 // loop_header_branch
                  %547 = sbr.rel (%p545) target = $region54
                $region51: #{mem_forward.3} parent=46 // loop_body
                  %v551 = vld [vmem:[%s549] sm:$0xff]
                  %552 = vst [vmem:[%s550] sm:$0xff] %v551
                  %v553 = vld [vmem:[%s549 + $0x8] sm:$0xff]
                  %554 = vst [vmem:[%s550 + $0x8] sm:$0xff] %v553
                  %v555 = vld [vmem:[%s549 + $0x10] sm:$0xff]
                  %556 = vst [vmem:[%s550 + $0x10] sm:$0xff] %v555
                  %v557 = vld [vmem:[%s549 + $0x18] sm:$0xff]
                  %558 = vst [vmem:[%s550 + $0x18] sm:$0xff] %v557
                  %v559 = vld [vmem:[%s549 + $0x20] sm:$0xff]
                  %560 = vst [vmem:[%s550 + $0x20] sm:$0xff] %v559
                  %v561 = vld [vmem:[%s549 + $0x28] sm:$0xff]
                  %562 = vst [vmem:[%s550 + $0x28] sm:$0xff] %v561
                  %v563 = vld [vmem:[%s549 + $0x30] sm:$0xff]
                  %564 = vst [vmem:[%s550 + $0x30] sm:$0xff] %v563
                  %v565 = vld [vmem:[%s549 + $0x38] sm:$0xff]
                  %566 = vst [vmem:[%s550 + $0x38] sm:$0xff] %v565
                  %v567 = vld [vmem:[%s549 + $0x40] sm:$0xff]
                  %568 = vst [vmem:[%s550 + $0x40] sm:$0xff] %v567
                  %v569 = vld [vmem:[%s549 + $0x48] sm:$0xff]
                  %570 = vst [vmem:[%s550 + $0x48] sm:$0xff] %v569
                  %v571 = vld [vmem:[%s549 + $0x50] sm:$0xff]
                  %572 = vst [vmem:[%s550 + $0x50] sm:$0xff] %v571
                  %v573 = vld [vmem:[%s549 + $0x58] sm:$0xff]
                  %574 = vst [vmem:[%s550 + $0x58] sm:$0xff] %v573
                  %v575 = vld [vmem:[%s549 + $0x60] sm:$0xff]
                  %576 = vst [vmem:[%s550 + $0x60] sm:$0xff] %v575
                  %v577 = vld [vmem:[%s549 + $0x68] sm:$0xff]
                  %578 = vst [vmem:[%s550 + $0x68] sm:$0xff] %v577
                  %v579 = vld [vmem:[%s549 + $0x70] sm:$0xff]
                  %580 = vst [vmem:[%s550 + $0x70] sm:$0xff] %v579
                  %v581 = vld [vmem:[%s549 + $0x78] sm:$0xff]
                  %582 = vst [vmem:[%s550 + $0x78] sm:$0xff] %v581
                  %v583 = vld [vmem:[%s549 + $0x80] sm:$0xff]
                  %584 = vst [vmem:[%s550 + $0x80] sm:$0xff] %v583
                  %v585 = vld [vmem:[%s549 + $0x88] sm:$0xff]
                  %586 = vst [vmem:[%s550 + $0x88] sm:$0xff] %v585
                  %v587 = vld [vmem:[%s549 + $0x90] sm:$0xff]
                  %588 = vst [vmem:[%s550 + $0x90] sm:$0xff] %v587
                  %v589 = vld [vmem:[%s549 + $0x98] sm:$0xff]
                  %590 = vst [vmem:[%s550 + $0x98] sm:$0xff] %v589
                  %v591 = vld [vmem:[%s549 + $0xa0] sm:$0xff]
                  %592 = vst [vmem:[%s550 + $0xa0] sm:$0xff] %v591
                  %v593 = vld [vmem:[%s549 + $0xa8] sm:$0xff]
                  %594 = vst [vmem:[%s550 + $0xa8] sm:$0xff] %v593
                  %v595 = vld [vmem:[%s549 + $0xb0] sm:$0xff]
                  %596 = vst [vmem:[%s550 + $0xb0] sm:$0xff] %v595
                  %v597 = vld [vmem:[%s549 + $0xb8] sm:$0xff]
                  %598 = vst [vmem:[%s550 + $0xb8] sm:$0xff] %v597
                  %v599 = vld [vmem:[%s549 + $0x180] sm:$0xff]
                  %600 = vst [vmem:[%s550 + $0xc0] sm:$0xff] %v599
                  %v601 = vld [vmem:[%s549 + $0x188] sm:$0xff]
                  %602 = vst [vmem:[%s550 + $0xc8] sm:$0xff] %v601
                  %v603 = vld [vmem:[%s549 + $0x190] sm:$0xff]
                  %604 = vst [vmem:[%s550 + $0xd0] sm:$0xff] %v603
                  %v605 = vld [vmem:[%s549 + $0x198] sm:$0xff]
                  %606 = vst [vmem:[%s550 + $0xd8] sm:$0xff] %v605
                  %v607 = vld [vmem:[%s549 + $0x1a0] sm:$0xff]
                  %608 = vst [vmem:[%s550 + $0xe0] sm:$0xff] %v607
                  %v609 = vld [vmem:[%s549 + $0x1a8] sm:$0xff]
                  %610 = vst [vmem:[%s550 + $0xe8] sm:$0xff] %v609
                  %v611 = vld [vmem:[%s549 + $0x1b0] sm:$0xff]
                  %612 = vst [vmem:[%s550 + $0xf0] sm:$0xff] %v611
                  %v613 = vld [vmem:[%s549 + $0x1b8] sm:$0xff]
                  %614 = vst [vmem:[%s550 + $0xf8] sm:$0xff] %v613
                  %v615 = vld [vmem:[%s549 + $0x1c0] sm:$0xff]
                  %616 = vst [vmem:[%s550 + $0x100] sm:$0xff] %v615
                  %v617 = vld [vmem:[%s549 + $0x1c8] sm:$0xff]
                  %618 = vst [vmem:[%s550 + $0x108] sm:$0xff] %v617
                  %v619 = vld [vmem:[%s549 + $0x1d0] sm:$0xff]
                  %620 = vst [vmem:[%s550 + $0x110] sm:$0xff] %v619
                  %v621 = vld [vmem:[%s549 + $0x1d8] sm:$0xff]
                  %622 = vst [vmem:[%s550 + $0x118] sm:$0xff] %v621
                  %v623 = vld [vmem:[%s549 + $0x1e0] sm:$0xff]
                  %624 = vst [vmem:[%s550 + $0x120] sm:$0xff] %v623
                  %v625 = vld [vmem:[%s549 + $0x1e8] sm:$0xff]
                  %626 = vst [vmem:[%s550 + $0x128] sm:$0xff] %v625
                  %v627 = vld [vmem:[%s549 + $0x1f0] sm:$0xff]
                  %628 = vst [vmem:[%s550 + $0x130] sm:$0xff] %v627
                  %v629 = vld [vmem:[%s549 + $0x1f8] sm:$0xff]
                  %630 = vst [vmem:[%s550 + $0x138] sm:$0xff] %v629
                  %v631 = vld [vmem:[%s549 + $0x200] sm:$0xff]
                  %632 = vst [vmem:[%s550 + $0x140] sm:$0xff] %v631
                  %v633 = vld [vmem:[%s549 + $0x208] sm:$0xff]
                  %634 = vst [vmem:[%s550 + $0x148] sm:$0xff] %v633
                  %v635 = vld [vmem:[%s549 + $0x210] sm:$0xff]
                  %636 = vst [vmem:[%s550 + $0x150] sm:$0xff] %v635
                  %v637 = vld [vmem:[%s549 + $0x218] sm:$0xff]
                  %638 = vst [vmem:[%s550 + $0x158] sm:$0xff] %v637
                  %v639 = vld [vmem:[%s549 + $0x220] sm:$0xff]
                  %640 = vst [vmem:[%s550 + $0x160] sm:$0xff] %v639
                  %v641 = vld [vmem:[%s549 + $0x228] sm:$0xff]
                  %642 = vst [vmem:[%s550 + $0x168] sm:$0xff] %v641
                  %v643 = vld [vmem:[%s549 + $0x230] sm:$0xff]
                  %644 = vst [vmem:[%s550 + $0x170] sm:$0xff] %v643
                  %v645 = vld [vmem:[%s549 + $0x238] sm:$0xff]
                  %646 = vst [vmem:[%s550 + $0x178] sm:$0xff] %v645
                  %v647 = vld [vmem:[%s549 + $0x300] sm:$0xff]
                  %648 = vst [vmem:[%s550 + $0x180] sm:$0xff] %v647
                  %v649 = vld [vmem:[%s549 + $0x308] sm:$0xff]
                  %650 = vst [vmem:[%s550 + $0x188] sm:$0xff] %v649
                  %v651 = vld [vmem:[%s549 + $0x310] sm:$0xff]
                  %652 = vst [vmem:[%s550 + $0x190] sm:$0xff] %v651
                  %v653 = vld [vmem:[%s549 + $0x318] sm:$0xff]
                  %654 = vst [vmem:[%s550 + $0x198] sm:$0xff] %v653
                  %v655 = vld [vmem:[%s549 + $0x320] sm:$0xff]
                  %656 = vst [vmem:[%s550 + $0x1a0] sm:$0xff] %v655
                  %v657 = vld [vmem:[%s549 + $0x328] sm:$0xff]
                  %658 = vst [vmem:[%s550 + $0x1a8] sm:$0xff] %v657
                  %v659 = vld [vmem:[%s549 + $0x330] sm:$0xff]
                  %660 = vst [vmem:[%s550 + $0x1b0] sm:$0xff] %v659
                  %v661 = vld [vmem:[%s549 + $0x338] sm:$0xff]
                  %662 = vst [vmem:[%s550 + $0x1b8] sm:$0xff] %v661
                  %v663 = vld [vmem:[%s549 + $0x340] sm:$0xff]
                  %664 = vst [vmem:[%s550 + $0x1c0] sm:$0xff] %v663
                  %v665 = vld [vmem:[%s549 + $0x348] sm:$0xff]
                  %666 = vst [vmem:[%s550 + $0x1c8] sm:$0xff] %v665
                  %v667 = vld [vmem:[%s549 + $0x350] sm:$0xff]
                  %668 = vst [vmem:[%s550 + $0x1d0] sm:$0xff] %v667
                  %v669 = vld [vmem:[%s549 + $0x358] sm:$0xff]
                  %670 = vst [vmem:[%s550 + $0x1d8] sm:$0xff] %v669
                  %v671 = vld [vmem:[%s549 + $0x360] sm:$0xff]
                  %672 = vst [vmem:[%s550 + $0x1e0] sm:$0xff] %v671
                  %v673 = vld [vmem:[%s549 + $0x368] sm:$0xff]
                  %674 = vst [vmem:[%s550 + $0x1e8] sm:$0xff] %v673
                  %v675 = vld [vmem:[%s549 + $0x370] sm:$0xff]
                  %676 = vst [vmem:[%s550 + $0x1f0] sm:$0xff] %v675
                  %v677 = vld [vmem:[%s549 + $0x378] sm:$0xff]
                  %678 = vst [vmem:[%s550 + $0x1f8] sm:$0xff] %v677
                  %v679 = vld [vmem:[%s549 + $0x380] sm:$0xff]
                  %680 = vst [vmem:[%s550 + $0x200] sm:$0xff] %v679
                  %v681 = vld [vmem:[%s549 + $0x388] sm:$0xff]
                  %682 = vst [vmem:[%s550 + $0x208] sm:$0xff] %v681
                  %v683 = vld [vmem:[%s549 + $0x390] sm:$0xff]
                  %684 = vst [vmem:[%s550 + $0x210] sm:$0xff] %v683
                  %v685 = vld [vmem:[%s549 + $0x398] sm:$0xff]
                  %686 = vst [vmem:[%s550 + $0x218] sm:$0xff] %v685
                  %v687 = vld [vmem:[%s549 + $0x3a0] sm:$0xff]
                  %688 = vst [vmem:[%s550 + $0x220] sm:$0xff] %v687
                  %v689 = vld [vmem:[%s549 + $0x3a8] sm:$0xff]
                  %690 = vst [vmem:[%s550 + $0x228] sm:$0xff] %v689
                  %v691 = vld [vmem:[%s549 + $0x3b0] sm:$0xff]
                  %692 = vst [vmem:[%s550 + $0x230] sm:$0xff] %v691
                  %v693 = vld [vmem:[%s549 + $0x3b8] sm:$0xff]
                  %694 = vst [vmem:[%s550 + $0x238] sm:$0xff] %v693
                  %v695 = vld [vmem:[%s549 + $0x480] sm:$0xff]
                  %696 = vst [vmem:[%s550 + $0x240] sm:$0xff] %v695
                  %v697 = vld [vmem:[%s549 + $0x488] sm:$0xff]
                  %698 = vst [vmem:[%s550 + $0x248] sm:$0xff] %v697
                  %v699 = vld [vmem:[%s549 + $0x490] sm:$0xff]
                  %700 = vst [vmem:[%s550 + $0x250] sm:$0xff] %v699
                  %v701 = vld [vmem:[%s549 + $0x498] sm:$0xff]
                  %702 = vst [vmem:[%s550 + $0x258] sm:$0xff] %v701
                  %v703 = vld [vmem:[%s549 + $0x4a0] sm:$0xff]
                  %704 = vst [vmem:[%s550 + $0x260] sm:$0xff] %v703
                  %v705 = vld [vmem:[%s549 + $0x4a8] sm:$0xff]
                  %706 = vst [vmem:[%s550 + $0x268] sm:$0xff] %v705
                  %v707 = vld [vmem:[%s549 + $0x4b0] sm:$0xff]
                  %708 = vst [vmem:[%s550 + $0x270] sm:$0xff] %v707
                  %v709 = vld [vmem:[%s549 + $0x4b8] sm:$0xff]
                  %710 = vst [vmem:[%s550 + $0x278] sm:$0xff] %v709
                  %v711 = vld [vmem:[%s549 + $0x4c0] sm:$0xff]
                  %712 = vst [vmem:[%s550 + $0x280] sm:$0xff] %v711
                  %v713 = vld [vmem:[%s549 + $0x4c8] sm:$0xff]
                  %714 = vst [vmem:[%s550 + $0x288] sm:$0xff] %v713
                  %v715 = vld [vmem:[%s549 + $0x4d0] sm:$0xff]
                  %716 = vst [vmem:[%s550 + $0x290] sm:$0xff] %v715
                  %v717 = vld [vmem:[%s549 + $0x4d8] sm:$0xff]
                  %718 = vst [vmem:[%s550 + $0x298] sm:$0xff] %v717
                  %v719 = vld [vmem:[%s549 + $0x4e0] sm:$0xff]
                  %720 = vst [vmem:[%s550 + $0x2a0] sm:$0xff] %v719
                  %v721 = vld [vmem:[%s549 + $0x4e8] sm:$0xff]
                  %722 = vst [vmem:[%s550 + $0x2a8] sm:$0xff] %v721
                  %v723 = vld [vmem:[%s549 + $0x4f0] sm:$0xff]
                  %724 = vst [vmem:[%s550 + $0x2b0] sm:$0xff] %v723
                  %v725 = vld [vmem:[%s549 + $0x4f8] sm:$0xff]
                  %726 = vst [vmem:[%s550 + $0x2b8] sm:$0xff] %v725
                  %v727 = vld [vmem:[%s549 + $0x500] sm:$0xff]
                  %728 = vst [vmem:[%s550 + $0x2c0] sm:$0xff] %v727
                  %v729 = vld [vmem:[%s549 + $0x508] sm:$0xff]
                  %730 = vst [vmem:[%s550 + $0x2c8] sm:$0xff] %v729
                  %v731 = vld [vmem:[%s549 + $0x510] sm:$0xff]
                  %732 = vst [vmem:[%s550 + $0x2d0] sm:$0xff] %v731
                  %v733 = vld [vmem:[%s549 + $0x518] sm:$0xff]
                  %734 = vst [vmem:[%s550 + $0x2d8] sm:$0xff] %v733
                  %v735 = vld [vmem:[%s549 + $0x520] sm:$0xff]
                  %736 = vst [vmem:[%s550 + $0x2e0] sm:$0xff] %v735
                  %v737 = vld [vmem:[%s549 + $0x528] sm:$0xff]
                  %738 = vst [vmem:[%s550 + $0x2e8] sm:$0xff] %v737
                  %v739 = vld [vmem:[%s549 + $0x530] sm:$0xff]
                  %740 = vst [vmem:[%s550 + $0x2f0] sm:$0xff] %v739
                  %v741 = vld [vmem:[%s549 + $0x538] sm:$0xff]
                  %742 = vst [vmem:[%s550 + $0x2f8] sm:$0xff] %v741
                  %v743 = vld [vmem:[%s549 + $0x600] sm:$0xff]
                  %744 = vst [vmem:[%s550 + $0x300] sm:$0xff] %v743
                  %v745 = vld [vmem:[%s549 + $0x608] sm:$0xff]
                  %746 = vst [vmem:[%s550 + $0x308] sm:$0xff] %v745
                  %v747 = vld [vmem:[%s549 + $0x610] sm:$0xff]
                  %748 = vst [vmem:[%s550 + $0x310] sm:$0xff] %v747
                  %v749 = vld [vmem:[%s549 + $0x618] sm:$0xff]
                  %750 = vst [vmem:[%s550 + $0x318] sm:$0xff] %v749
                  %v751 = vld [vmem:[%s549 + $0x620] sm:$0xff]
                  %752 = vst [vmem:[%s550 + $0x320] sm:$0xff] %v751
                  %v753 = vld [vmem:[%s549 + $0x628] sm:$0xff]
                  %754 = vst [vmem:[%s550 + $0x328] sm:$0xff] %v753
                  %v755 = vld [vmem:[%s549 + $0x630] sm:$0xff]
                  %756 = vst [vmem:[%s550 + $0x330] sm:$0xff] %v755
                  %v757 = vld [vmem:[%s549 + $0x638] sm:$0xff]
                  %758 = vst [vmem:[%s550 + $0x338] sm:$0xff] %v757
                  %v759 = vld [vmem:[%s549 + $0x640] sm:$0xff]
                  %760 = vst [vmem:[%s550 + $0x340] sm:$0xff] %v759
                  %v761 = vld [vmem:[%s549 + $0x648] sm:$0xff]
                  %762 = vst [vmem:[%s550 + $0x348] sm:$0xff] %v761
                  %v763 = vld [vmem:[%s549 + $0x650] sm:$0xff]
                  %764 = vst [vmem:[%s550 + $0x350] sm:$0xff] %v763
                  %v765 = vld [vmem:[%s549 + $0x658] sm:$0xff]
                  %766 = vst [vmem:[%s550 + $0x358] sm:$0xff] %v765
                  %v767 = vld [vmem:[%s549 + $0x660] sm:$0xff]
                  %768 = vst [vmem:[%s550 + $0x360] sm:$0xff] %v767
                  %v769 = vld [vmem:[%s549 + $0x668] sm:$0xff]
                  %770 = vst [vmem:[%s550 + $0x368] sm:$0xff] %v769
                  %v771 = vld [vmem:[%s549 + $0x670] sm:$0xff]
                  %772 = vst [vmem:[%s550 + $0x370] sm:$0xff] %v771
                  %v773 = vld [vmem:[%s549 + $0x678] sm:$0xff]
                  %774 = vst [vmem:[%s550 + $0x378] sm:$0xff] %v773
                  %v775 = vld [vmem:[%s549 + $0x680] sm:$0xff]
                  %776 = vst [vmem:[%s550 + $0x380] sm:$0xff] %v775
                  %v777 = vld [vmem:[%s549 + $0x688] sm:$0xff]
                  %778 = vst [vmem:[%s550 + $0x388] sm:$0xff] %v777
                  %v779 = vld [vmem:[%s549 + $0x690] sm:$0xff]
                  %780 = vst [vmem:[%s550 + $0x390] sm:$0xff] %v779
                  %v781 = vld [vmem:[%s549 + $0x698] sm:$0xff]
                  %782 = vst [vmem:[%s550 + $0x398] sm:$0xff] %v781
                  %v783 = vld [vmem:[%s549 + $0x6a0] sm:$0xff]
                  %784 = vst [vmem:[%s550 + $0x3a0] sm:$0xff] %v783
                  %v785 = vld [vmem:[%s549 + $0x6a8] sm:$0xff]
                  %786 = vst [vmem:[%s550 + $0x3a8] sm:$0xff] %v785
                  %v787 = vld [vmem:[%s549 + $0x6b0] sm:$0xff]
                  %788 = vst [vmem:[%s550 + $0x3b0] sm:$0xff] %v787
                  %v789 = vld [vmem:[%s549 + $0x6b8] sm:$0xff]
                  %790 = vst [vmem:[%s550 + $0x3b8] sm:$0xff] %v789
                  %v791 = vld [vmem:[%s549 + $0x780] sm:$0xff]
                  %792 = vst [vmem:[%s550 + $0x3c0] sm:$0xff] %v791
                  %v793 = vld [vmem:[%s549 + $0x788] sm:$0xff]
                  %794 = vst [vmem:[%s550 + $0x3c8] sm:$0xff] %v793
                  %v795 = vld [vmem:[%s549 + $0x790] sm:$0xff]
                  %796 = vst [vmem:[%s550 + $0x3d0] sm:$0xff] %v795
                  %v797 = vld [vmem:[%s549 + $0x798] sm:$0xff]
                  %798 = vst [vmem:[%s550 + $0x3d8] sm:$0xff] %v797
                  %v799 = vld [vmem:[%s549 + $0x7a0] sm:$0xff]
                  %800 = vst [vmem:[%s550 + $0x3e0] sm:$0xff] %v799
                  %v801 = vld [vmem:[%s549 + $0x7a8] sm:$0xff]
                  %802 = vst [vmem:[%s550 + $0x3e8] sm:$0xff] %v801
                  %v803 = vld [vmem:[%s549 + $0x7b0] sm:$0xff]
                  %804 = vst [vmem:[%s550 + $0x3f0] sm:$0xff] %v803
                  %v805 = vld [vmem:[%s549 + $0x7b8] sm:$0xff]
                  %806 = vst [vmem:[%s550 + $0x3f8] sm:$0xff] %v805
                  %v807 = vld [vmem:[%s549 + $0x7c0] sm:$0xff]
                  %808 = vst [vmem:[%s550 + $0x400] sm:$0xff] %v807
                  %v809 = vld [vmem:[%s549 + $0x7c8] sm:$0xff]
                  %810 = vst [vmem:[%s550 + $0x408] sm:$0xff] %v809
                  %v811 = vld [vmem:[%s549 + $0x7d0] sm:$0xff]
                  %812 = vst [vmem:[%s550 + $0x410] sm:$0xff] %v811
                  %v813 = vld [vmem:[%s549 + $0x7d8] sm:$0xff]
                  %814 = vst [vmem:[%s550 + $0x418] sm:$0xff] %v813
                  %v815 = vld [vmem:[%s549 + $0x7e0] sm:$0xff]
                  %816 = vst [vmem:[%s550 + $0x420] sm:$0xff] %v815
                  %v817 = vld [vmem:[%s549 + $0x7e8] sm:$0xff]
                  %818 = vst [vmem:[%s550 + $0x428] sm:$0xff] %v817
                  %v819 = vld [vmem:[%s549 + $0x7f0] sm:$0xff]
                  %820 = vst [vmem:[%s550 + $0x430] sm:$0xff] %v819
                  %v821 = vld [vmem:[%s549 + $0x7f8] sm:$0xff]
                  %822 = vst [vmem:[%s550 + $0x438] sm:$0xff] %v821
                  %v823 = vld [vmem:[%s549 + $0x800] sm:$0xff]
                  %824 = vst [vmem:[%s550 + $0x440] sm:$0xff] %v823
                  %v825 = vld [vmem:[%s549 + $0x808] sm:$0xff]
                  %826 = vst [vmem:[%s550 + $0x448] sm:$0xff] %v825
                  %v827 = vld [vmem:[%s549 + $0x810] sm:$0xff]
                  %828 = vst [vmem:[%s550 + $0x450] sm:$0xff] %v827
                  %v829 = vld [vmem:[%s549 + $0x818] sm:$0xff]
                  %830 = vst [vmem:[%s550 + $0x458] sm:$0xff] %v829
                  %v831 = vld [vmem:[%s549 + $0x820] sm:$0xff]
                  %832 = vst [vmem:[%s550 + $0x460] sm:$0xff] %v831
                  %v833 = vld [vmem:[%s549 + $0x828] sm:$0xff]
                  %834 = vst [vmem:[%s550 + $0x468] sm:$0xff] %v833
                  %v835 = vld [vmem:[%s549 + $0x830] sm:$0xff]
                  %836 = vst [vmem:[%s550 + $0x470] sm:$0xff] %v835
                  %v837 = vld [vmem:[%s549 + $0x838] sm:$0xff]
                  %838 = vst [vmem:[%s550 + $0x478] sm:$0xff] %v837
                  %v839 = vld [vmem:[%s549 + $0x900] sm:$0xff]
                  %840 = vst [vmem:[%s550 + $0x480] sm:$0xff] %v839
                  %v841 = vld [vmem:[%s549 + $0x908] sm:$0xff]
                  %842 = vst [vmem:[%s550 + $0x488] sm:$0xff] %v841
                  %v843 = vld [vmem:[%s549 + $0x910] sm:$0xff]
                  %844 = vst [vmem:[%s550 + $0x490] sm:$0xff] %v843
                  %v845 = vld [vmem:[%s549 + $0x918] sm:$0xff]
                  %846 = vst [vmem:[%s550 + $0x498] sm:$0xff] %v845
                  %v847 = vld [vmem:[%s549 + $0x920] sm:$0xff]
                  %848 = vst [vmem:[%s550 + $0x4a0] sm:$0xff] %v847
                  %v849 = vld [vmem:[%s549 + $0x928] sm:$0xff]
                  %850 = vst [vmem:[%s550 + $0x4a8] sm:$0xff] %v849
                  %v851 = vld [vmem:[%s549 + $0x930] sm:$0xff]
                  %852 = vst [vmem:[%s550 + $0x4b0] sm:$0xff] %v851
                  %v853 = vld [vmem:[%s549 + $0x938] sm:$0xff]
                  %854 = vst [vmem:[%s550 + $0x4b8] sm:$0xff] %v853
                  %v855 = vld [vmem:[%s549 + $0x940] sm:$0xff]
                  %856 = vst [vmem:[%s550 + $0x4c0] sm:$0xff] %v855
                  %v857 = vld [vmem:[%s549 + $0x948] sm:$0xff]
                  %858 = vst [vmem:[%s550 + $0x4c8] sm:$0xff] %v857
                  %v859 = vld [vmem:[%s549 + $0x950] sm:$0xff]
                  %860 = vst [vmem:[%s550 + $0x4d0] sm:$0xff] %v859
                  %v861 = vld [vmem:[%s549 + $0x958] sm:$0xff]
                  %862 = vst [vmem:[%s550 + $0x4d8] sm:$0xff] %v861
                  %v863 = vld [vmem:[%s549 + $0x960] sm:$0xff]
                  %864 = vst [vmem:[%s550 + $0x4e0] sm:$0xff] %v863
                  %v865 = vld [vmem:[%s549 + $0x968] sm:$0xff]
                  %866 = vst [vmem:[%s550 + $0x4e8] sm:$0xff] %v865
                  %v867 = vld [vmem:[%s549 + $0x970] sm:$0xff]
                  %868 = vst [vmem:[%s550 + $0x4f0] sm:$0xff] %v867
                  %v869 = vld [vmem:[%s549 + $0x978] sm:$0xff]
                  %870 = vst [vmem:[%s550 + $0x4f8] sm:$0xff] %v869
                  %v871 = vld [vmem:[%s549 + $0x980] sm:$0xff]
                  %872 = vst [vmem:[%s550 + $0x500] sm:$0xff] %v871
                  %v873 = vld [vmem:[%s549 + $0x988] sm:$0xff]
                  %874 = vst [vmem:[%s550 + $0x508] sm:$0xff] %v873
                  %v875 = vld [vmem:[%s549 + $0x990] sm:$0xff]
                  %876 = vst [vmem:[%s550 + $0x510] sm:$0xff] %v875
                  %v877 = vld [vmem:[%s549 + $0x998] sm:$0xff]
                  %878 = vst [vmem:[%s550 + $0x518] sm:$0xff] %v877
                  %v879 = vld [vmem:[%s549 + $0x9a0] sm:$0xff]
                  %880 = vst [vmem:[%s550 + $0x520] sm:$0xff] %v879
                  %v881 = vld [vmem:[%s549 + $0x9a8] sm:$0xff]
                  %882 = vst [vmem:[%s550 + $0x528] sm:$0xff] %v881
                  %v883 = vld [vmem:[%s549 + $0x9b0] sm:$0xff]
                  %884 = vst [vmem:[%s550 + $0x530] sm:$0xff] %v883
                  %v885 = vld [vmem:[%s549 + $0x9b8] sm:$0xff]
                  %886 = vst [vmem:[%s550 + $0x538] sm:$0xff] %v885
                  %v887 = vld [vmem:[%s549 + $0xa80] sm:$0xff]
                  %888 = vst [vmem:[%s550 + $0x540] sm:$0xff] %v887
                  %v889 = vld [vmem:[%s549 + $0xa88] sm:$0xff]
                  %890 = vst [vmem:[%s550 + $0x548] sm:$0xff] %v889
                  %v891 = vld [vmem:[%s549 + $0xa90] sm:$0xff]
                  %892 = vst [vmem:[%s550 + $0x550] sm:$0xff] %v891
                  %v893 = vld [vmem:[%s549 + $0xa98] sm:$0xff]
                  %894 = vst [vmem:[%s550 + $0x558] sm:$0xff] %v893
                  %v895 = vld [vmem:[%s549 + $0xaa0] sm:$0xff]
                  %896 = vst [vmem:[%s550 + $0x560] sm:$0xff] %v895
                  %v897 = vld [vmem:[%s549 + $0xaa8] sm:$0xff]
                  %898 = vst [vmem:[%s550 + $0x568] sm:$0xff] %v897
                  %v899 = vld [vmem:[%s549 + $0xab0] sm:$0xff]
                  %900 = vst [vmem:[%s550 + $0x570] sm:$0xff] %v899
                  %v901 = vld [vmem:[%s549 + $0xab8] sm:$0xff]
                  %902 = vst [vmem:[%s550 + $0x578] sm:$0xff] %v901
                  %v903 = vld [vmem:[%s549 + $0xac0] sm:$0xff]
                  %904 = vst [vmem:[%s550 + $0x580] sm:$0xff] %v903
                  %v905 = vld [vmem:[%s549 + $0xac8] sm:$0xff]
                  %906 = vst [vmem:[%s550 + $0x588] sm:$0xff] %v905
                  %v907 = vld [vmem:[%s549 + $0xad0] sm:$0xff]
                  %908 = vst [vmem:[%s550 + $0x590] sm:$0xff] %v907
                  %v909 = vld [vmem:[%s549 + $0xad8] sm:$0xff]
                  %910 = vst [vmem:[%s550 + $0x598] sm:$0xff] %v909
                  %v911 = vld [vmem:[%s549 + $0xae0] sm:$0xff]
                  %912 = vst [vmem:[%s550 + $0x5a0] sm:$0xff] %v911
                  %v913 = vld [vmem:[%s549 + $0xae8] sm:$0xff]
                  %914 = vst [vmem:[%s550 + $0x5a8] sm:$0xff] %v913
                  %v915 = vld [vmem:[%s549 + $0xaf0] sm:$0xff]
                  %916 = vst [vmem:[%s550 + $0x5b0] sm:$0xff] %v915
                  %v917 = vld [vmem:[%s549 + $0xaf8] sm:$0xff]
                  %918 = vst [vmem:[%s550 + $0x5b8] sm:$0xff] %v917
                  %v919 = vld [vmem:[%s549 + $0xb00] sm:$0xff]
                  %920 = vst [vmem:[%s550 + $0x5c0] sm:$0xff] %v919
                  %v921 = vld [vmem:[%s549 + $0xb08] sm:$0xff]
                  %922 = vst [vmem:[%s550 + $0x5c8] sm:$0xff] %v921
                  %v923 = vld [vmem:[%s549 + $0xb10] sm:$0xff]
                  %924 = vst [vmem:[%s550 + $0x5d0] sm:$0xff] %v923
                  %v925 = vld [vmem:[%s549 + $0xb18] sm:$0xff]
                  %926 = vst [vmem:[%s550 + $0x5d8] sm:$0xff] %v925
                  %v927 = vld [vmem:[%s549 + $0xb20] sm:$0xff]
                  %928 = vst [vmem:[%s550 + $0x5e0] sm:$0xff] %v927
                  %v929 = vld [vmem:[%s549 + $0xb28] sm:$0xff]
                  %930 = vst [vmem:[%s550 + $0x5e8] sm:$0xff] %v929
                  %v931 = vld [vmem:[%s549 + $0xb30] sm:$0xff]
                  %932 = vst [vmem:[%s550 + $0x5f0] sm:$0xff] %v931
                  %v933 = vld [vmem:[%s549 + $0xb38] sm:$0xff]
                  %934 = vst [vmem:[%s550 + $0x5f8] sm:$0xff] %v933
                $region52: #{mem_forward.3} parent=46 // loop_footer
                  %s548 = sadd.s32 1, %s544
                $region53: #{mem_forward.3} parent=46 // loop_footer_branch
                  %543 = sbr.rel target = $region49
                $region54: #{mem_forward.3} parent=46 // loop_exit
                  _
              $region47: #{mem_forward.3} parent=31 // pred_fallthru
                _
              // Predicated region
              $region55: #{mem_forward.3} parent=31 // pred_check
                _
              $region56: #{mem_forward.3} parent=31 // pred_check_branch
                %936 = sbr.rel target = $region58
              $region57: #{mem_forward.3} parent=31 // pred_region
                _
              $region58: #{mem_forward.3} parent=31 // pred_fallthru
                _
            $region32: #{mem_forward.3} parent=27 // pred_fallthru
              _
            // Predicated region
            $region33: #{mem_forward.3} parent=27 // pred_check
              _
            $region34: #{mem_forward.3} parent=27 // pred_check_branch
              %147 = sbr.rel target = $region36
            $region35: #{mem_forward.3} parent=27 // pred_region
              loop: start=0, step=1, limit=1
              $region37: #{mem_forward.3} parent=35 // loop_pre_header
                _
              $region38: #{mem_forward.3} parent=35 // loop_header
                %s150 = sphi 0, %s154
                %p151 = scmp.ge.s32.totalorder %s150, 1
                %s155 = sphi %s141, %s141
                %s156 = sphi %s135, %s135
              $region39: #{mem_forward.3} parent=35 // loop_header_branch
                %153 = sbr.rel (%p151) target = $region43
              $region40: #{mem_forward.3} parent=35 // loop_body
                %v157 = vld [vmem:[%s155] sm:$0xff]
                %158 = vst [vmem:[%s156] sm:$0xff] %v157
                %v159 = vld [vmem:[%s155 + $0x8] sm:$0xff]
                %160 = vst [vmem:[%s156 + $0x8] sm:$0xff] %v159
                %v161 = vld [vmem:[%s155 + $0x10] sm:$0xff]
                %162 = vst [vmem:[%s156 + $0x10] sm:$0xff] %v161
                %v163 = vld [vmem:[%s155 + $0x18] sm:$0xff]
                %164 = vst [vmem:[%s156 + $0x18] sm:$0xff] %v163
                %v165 = vld [vmem:[%s155 + $0x20] sm:$0xff]
                %166 = vst [vmem:[%s156 + $0x20] sm:$0xff] %v165
                %v167 = vld [vmem:[%s155 + $0x28] sm:$0xff]
                %168 = vst [vmem:[%s156 + $0x28] sm:$0xff] %v167
                %v169 = vld [vmem:[%s155 + $0x30] sm:$0xff]
                %170 = vst [vmem:[%s156 + $0x30] sm:$0xff] %v169
                %v171 = vld [vmem:[%s155 + $0x38] sm:$0xff]
                %172 = vst [vmem:[%s156 + $0x38] sm:$0xff] %v171
                %v173 = vld [vmem:[%s155 + $0x40] sm:$0xff]
                %174 = vst [vmem:[%s156 + $0x40] sm:$0xff] %v173
                %v175 = vld [vmem:[%s155 + $0x48] sm:$0xff]
                %176 = vst [vmem:[%s156 + $0x48] sm:$0xff] %v175
                %v177 = vld [vmem:[%s155 + $0x50] sm:$0xff]
                %178 = vst [vmem:[%s156 + $0x50] sm:$0xff] %v177
                %v179 = vld [vmem:[%s155 + $0x58] sm:$0xff]
                %180 = vst [vmem:[%s156 + $0x58] sm:$0xff] %v179
                %v181 = vld [vmem:[%s155 + $0x60] sm:$0xff]
                %182 = vst [vmem:[%s156 + $0x60] sm:$0xff] %v181
                %v183 = vld [vmem:[%s155 + $0x68] sm:$0xff]
                %184 = vst [vmem:[%s156 + $0x68] sm:$0xff] %v183
                %v185 = vld [vmem:[%s155 + $0x70] sm:$0xff]
                %186 = vst [vmem:[%s156 + $0x70] sm:$0xff] %v185
                %v187 = vld [vmem:[%s155 + $0x78] sm:$0xff]
                %188 = vst [vmem:[%s156 + $0x78] sm:$0xff] %v187
                %v189 = vld [vmem:[%s155 + $0x80] sm:$0xff]
                %190 = vst [vmem:[%s156 + $0x80] sm:$0xff] %v189
                %v191 = vld [vmem:[%s155 + $0x88] sm:$0xff]
                %192 = vst [vmem:[%s156 + $0x88] sm:$0xff] %v191
                %v193 = vld [vmem:[%s155 + $0x90] sm:$0xff]
                %194 = vst [vmem:[%s156 + $0x90] sm:$0xff] %v193
                %v195 = vld [vmem:[%s155 + $0x98] sm:$0xff]
                %196 = vst [vmem:[%s156 + $0x98] sm:$0xff] %v195
                %v197 = vld [vmem:[%s155 + $0xa0] sm:$0xff]
                %198 = vst [vmem:[%s156 + $0xa0] sm:$0xff] %v197
                %v199 = vld [vmem:[%s155 + $0xa8] sm:$0xff]
                %200 = vst [vmem:[%s156 + $0xa8] sm:$0xff] %v199
                %v201 = vld [vmem:[%s155 + $0xb0] sm:$0xff]
                %202 = vst [vmem:[%s156 + $0xb0] sm:$0xff] %v201
                %v203 = vld [vmem:[%s155 + $0xb8] sm:$0xff]
                %204 = vst [vmem:[%s156 + $0xb8] sm:$0xff] %v203
                %v205 = vld [vmem:[%s155 + $0x180] sm:$0xff]
                %206 = vst [vmem:[%s156 + $0xc0] sm:$0xff] %v205
                %v207 = vld [vmem:[%s155 + $0x188] sm:$0xff]
                %208 = vst [vmem:[%s156 + $0xc8] sm:$0xff] %v207
                %v209 = vld [vmem:[%s155 + $0x190] sm:$0xff]
                %210 = vst [vmem:[%s156 + $0xd0] sm:$0xff] %v209
                %v211 = vld [vmem:[%s155 + $0x198] sm:$0xff]
                %212 = vst [vmem:[%s156 + $0xd8] sm:$0xff] %v211
                %v213 = vld [vmem:[%s155 + $0x1a0] sm:$0xff]
                %214 = vst [vmem:[%s156 + $0xe0] sm:$0xff] %v213
                %v215 = vld [vmem:[%s155 + $0x1a8] sm:$0xff]
                %216 = vst [vmem:[%s156 + $0xe8] sm:$0xff] %v215
                %v217 = vld [vmem:[%s155 + $0x1b0] sm:$0xff]
                %218 = vst [vmem:[%s156 + $0xf0] sm:$0xff] %v217
                %v219 = vld [vmem:[%s155 + $0x1b8] sm:$0xff]
                %220 = vst [vmem:[%s156 + $0xf8] sm:$0xff] %v219
                %v221 = vld [vmem:[%s155 + $0x1c0] sm:$0xff]
                %222 = vst [vmem:[%s156 + $0x100] sm:$0xff] %v221
                %v223 = vld [vmem:[%s155 + $0x1c8] sm:$0xff]
                %224 = vst [vmem:[%s156 + $0x108] sm:$0xff] %v223
                %v225 = vld [vmem:[%s155 + $0x1d0] sm:$0xff]
                %226 = vst [vmem:[%s156 + $0x110] sm:$0xff] %v225
                %v227 = vld [vmem:[%s155 + $0x1d8] sm:$0xff]
                %228 = vst [vmem:[%s156 + $0x118] sm:$0xff] %v227
                %v229 = vld [vmem:[%s155 + $0x1e0] sm:$0xff]
                %230 = vst [vmem:[%s156 + $0x120] sm:$0xff] %v229
                %v231 = vld [vmem:[%s155 + $0x1e8] sm:$0xff]
                %232 = vst [vmem:[%s156 + $0x128] sm:$0xff] %v231
                %v233 = vld [vmem:[%s155 + $0x1f0] sm:$0xff]
                %234 = vst [vmem:[%s156 + $0x130] sm:$0xff] %v233
                %v235 = vld [vmem:[%s155 + $0x1f8] sm:$0xff]
                %236 = vst [vmem:[%s156 + $0x138] sm:$0xff] %v235
                %v237 = vld [vmem:[%s155 + $0x200] sm:$0xff]
                %238 = vst [vmem:[%s156 + $0x140] sm:$0xff] %v237
                %v239 = vld [vmem:[%s155 + $0x208] sm:$0xff]
                %240 = vst [vmem:[%s156 + $0x148] sm:$0xff] %v239
                %v241 = vld [vmem:[%s155 + $0x210] sm:$0xff]
                %242 = vst [vmem:[%s156 + $0x150] sm:$0xff] %v241
                %v243 = vld [vmem:[%s155 + $0x218] sm:$0xff]
                %244 = vst [vmem:[%s156 + $0x158] sm:$0xff] %v243
                %v245 = vld [vmem:[%s155 + $0x220] sm:$0xff]
                %246 = vst [vmem:[%s156 + $0x160] sm:$0xff] %v245
                %v247 = vld [vmem:[%s155 + $0x228] sm:$0xff]
                %248 = vst [vmem:[%s156 + $0x168] sm:$0xff] %v247
                %v249 = vld [vmem:[%s155 + $0x230] sm:$0xff]
                %250 = vst [vmem:[%s156 + $0x170] sm:$0xff] %v249
                %v251 = vld [vmem:[%s155 + $0x238] sm:$0xff]
                %252 = vst [vmem:[%s156 + $0x178] sm:$0xff] %v251
                %v253 = vld [vmem:[%s155 + $0x300] sm:$0xff]
                %254 = vst [vmem:[%s156 + $0x180] sm:$0xff] %v253
                %v255 = vld [vmem:[%s155 + $0x308] sm:$0xff]
                %256 = vst [vmem:[%s156 + $0x188] sm:$0xff] %v255
                %v257 = vld [vmem:[%s155 + $0x310] sm:$0xff]
                %258 = vst [vmem:[%s156 + $0x190] sm:$0xff] %v257
                %v259 = vld [vmem:[%s155 + $0x318] sm:$0xff]
                %260 = vst [vmem:[%s156 + $0x198] sm:$0xff] %v259
                %v261 = vld [vmem:[%s155 + $0x320] sm:$0xff]
                %262 = vst [vmem:[%s156 + $0x1a0] sm:$0xff] %v261
                %v263 = vld [vmem:[%s155 + $0x328] sm:$0xff]
                %264 = vst [vmem:[%s156 + $0x1a8] sm:$0xff] %v263
                %v265 = vld [vmem:[%s155 + $0x330] sm:$0xff]
                %266 = vst [vmem:[%s156 + $0x1b0] sm:$0xff] %v265
                %v267 = vld [vmem:[%s155 + $0x338] sm:$0xff]
                %268 = vst [vmem:[%s156 + $0x1b8] sm:$0xff] %v267
                %v269 = vld [vmem:[%s155 + $0x340] sm:$0xff]
                %270 = vst [vmem:[%s156 + $0x1c0] sm:$0xff] %v269
                %v271 = vld [vmem:[%s155 + $0x348] sm:$0xff]
                %272 = vst [vmem:[%s156 + $0x1c8] sm:$0xff] %v271
                %v273 = vld [vmem:[%s155 + $0x350] sm:$0xff]
                %274 = vst [vmem:[%s156 + $0x1d0] sm:$0xff] %v273
                %v275 = vld [vmem:[%s155 + $0x358] sm:$0xff]
                %276 = vst [vmem:[%s156 + $0x1d8] sm:$0xff] %v275
                %v277 = vld [vmem:[%s155 + $0x360] sm:$0xff]
                %278 = vst [vmem:[%s156 + $0x1e0] sm:$0xff] %v277
                %v279 = vld [vmem:[%s155 + $0x368] sm:$0xff]
                %280 = vst [vmem:[%s156 + $0x1e8] sm:$0xff] %v279
                %v281 = vld [vmem:[%s155 + $0x370] sm:$0xff]
                %282 = vst [vmem:[%s156 + $0x1f0] sm:$0xff] %v281
                %v283 = vld [vmem:[%s155 + $0x378] sm:$0xff]
                %284 = vst [vmem:[%s156 + $0x1f8] sm:$0xff] %v283
                %v285 = vld [vmem:[%s155 + $0x380] sm:$0xff]
                %286 = vst [vmem:[%s156 + $0x200] sm:$0xff] %v285
                %v287 = vld [vmem:[%s155 + $0x388] sm:$0xff]
                %288 = vst [vmem:[%s156 + $0x208] sm:$0xff] %v287
                %v289 = vld [vmem:[%s155 + $0x390] sm:$0xff]
                %290 = vst [vmem:[%s156 + $0x210] sm:$0xff] %v289
                %v291 = vld [vmem:[%s155 + $0x398] sm:$0xff]
                %292 = vst [vmem:[%s156 + $0x218] sm:$0xff] %v291
                %v293 = vld [vmem:[%s155 + $0x3a0] sm:$0xff]
                %294 = vst [vmem:[%s156 + $0x220] sm:$0xff] %v293
                %v295 = vld [vmem:[%s155 + $0x3a8] sm:$0xff]
                %296 = vst [vmem:[%s156 + $0x228] sm:$0xff] %v295
                %v297 = vld [vmem:[%s155 + $0x3b0] sm:$0xff]
                %298 = vst [vmem:[%s156 + $0x230] sm:$0xff] %v297
                %v299 = vld [vmem:[%s155 + $0x3b8] sm:$0xff]
                %300 = vst [vmem:[%s156 + $0x238] sm:$0xff] %v299
                %v301 = vld [vmem:[%s155 + $0x480] sm:$0xff]
                %302 = vst [vmem:[%s156 + $0x240] sm:$0xff] %v301
                %v303 = vld [vmem:[%s155 + $0x488] sm:$0xff]
                %304 = vst [vmem:[%s156 + $0x248] sm:$0xff] %v303
                %v305 = vld [vmem:[%s155 + $0x490] sm:$0xff]
                %306 = vst [vmem:[%s156 + $0x250] sm:$0xff] %v305
                %v307 = vld [vmem:[%s155 + $0x498] sm:$0xff]
                %308 = vst [vmem:[%s156 + $0x258] sm:$0xff] %v307
                %v309 = vld [vmem:[%s155 + $0x4a0] sm:$0xff]
                %310 = vst [vmem:[%s156 + $0x260] sm:$0xff] %v309
                %v311 = vld [vmem:[%s155 + $0x4a8] sm:$0xff]
                %312 = vst [vmem:[%s156 + $0x268] sm:$0xff] %v311
                %v313 = vld [vmem:[%s155 + $0x4b0] sm:$0xff]
                %314 = vst [vmem:[%s156 + $0x270] sm:$0xff] %v313
                %v315 = vld [vmem:[%s155 + $0x4b8] sm:$0xff]
                %316 = vst [vmem:[%s156 + $0x278] sm:$0xff] %v315
                %v317 = vld [vmem:[%s155 + $0x4c0] sm:$0xff]
                %318 = vst [vmem:[%s156 + $0x280] sm:$0xff] %v317
                %v319 = vld [vmem:[%s155 + $0x4c8] sm:$0xff]
                %320 = vst [vmem:[%s156 + $0x288] sm:$0xff] %v319
                %v321 = vld [vmem:[%s155 + $0x4d0] sm:$0xff]
                %322 = vst [vmem:[%s156 + $0x290] sm:$0xff] %v321
                %v323 = vld [vmem:[%s155 + $0x4d8] sm:$0xff]
                %324 = vst [vmem:[%s156 + $0x298] sm:$0xff] %v323
                %v325 = vld [vmem:[%s155 + $0x4e0] sm:$0xff]
                %326 = vst [vmem:[%s156 + $0x2a0] sm:$0xff] %v325
                %v327 = vld [vmem:[%s155 + $0x4e8] sm:$0xff]
                %328 = vst [vmem:[%s156 + $0x2a8] sm:$0xff] %v327
                %v329 = vld [vmem:[%s155 + $0x4f0] sm:$0xff]
                %330 = vst [vmem:[%s156 + $0x2b0] sm:$0xff] %v329
                %v331 = vld [vmem:[%s155 + $0x4f8] sm:$0xff]
                %332 = vst [vmem:[%s156 + $0x2b8] sm:$0xff] %v331
                %v333 = vld [vmem:[%s155 + $0x500] sm:$0xff]
                %334 = vst [vmem:[%s156 + $0x2c0] sm:$0xff] %v333
                %v335 = vld [vmem:[%s155 + $0x508] sm:$0xff]
                %336 = vst [vmem:[%s156 + $0x2c8] sm:$0xff] %v335
                %v337 = vld [vmem:[%s155 + $0x510] sm:$0xff]
                %338 = vst [vmem:[%s156 + $0x2d0] sm:$0xff] %v337
                %v339 = vld [vmem:[%s155 + $0x518] sm:$0xff]
                %340 = vst [vmem:[%s156 + $0x2d8] sm:$0xff] %v339
                %v341 = vld [vmem:[%s155 + $0x520] sm:$0xff]
                %342 = vst [vmem:[%s156 + $0x2e0] sm:$0xff] %v341
                %v343 = vld [vmem:[%s155 + $0x528] sm:$0xff]
                %344 = vst [vmem:[%s156 + $0x2e8] sm:$0xff] %v343
                %v345 = vld [vmem:[%s155 + $0x530] sm:$0xff]
                %346 = vst [vmem:[%s156 + $0x2f0] sm:$0xff] %v345
                %v347 = vld [vmem:[%s155 + $0x538] sm:$0xff]
                %348 = vst [vmem:[%s156 + $0x2f8] sm:$0xff] %v347
                %v349 = vld [vmem:[%s155 + $0x600] sm:$0xff]
                %350 = vst [vmem:[%s156 + $0x300] sm:$0xff] %v349
                %v351 = vld [vmem:[%s155 + $0x608] sm:$0xff]
                %352 = vst [vmem:[%s156 + $0x308] sm:$0xff] %v351
                %v353 = vld [vmem:[%s155 + $0x610] sm:$0xff]
                %354 = vst [vmem:[%s156 + $0x310] sm:$0xff] %v353
                %v355 = vld [vmem:[%s155 + $0x618] sm:$0xff]
                %356 = vst [vmem:[%s156 + $0x318] sm:$0xff] %v355
                %v357 = vld [vmem:[%s155 + $0x620] sm:$0xff]
                %358 = vst [vmem:[%s156 + $0x320] sm:$0xff] %v357
                %v359 = vld [vmem:[%s155 + $0x628] sm:$0xff]
                %360 = vst [vmem:[%s156 + $0x328] sm:$0xff] %v359
                %v361 = vld [vmem:[%s155 + $0x630] sm:$0xff]
                %362 = vst [vmem:[%s156 + $0x330] sm:$0xff] %v361
                %v363 = vld [vmem:[%s155 + $0x638] sm:$0xff]
                %364 = vst [vmem:[%s156 + $0x338] sm:$0xff] %v363
                %v365 = vld [vmem:[%s155 + $0x640] sm:$0xff]
                %366 = vst [vmem:[%s156 + $0x340] sm:$0xff] %v365
                %v367 = vld [vmem:[%s155 + $0x648] sm:$0xff]
                %368 = vst [vmem:[%s156 + $0x348] sm:$0xff] %v367
                %v369 = vld [vmem:[%s155 + $0x650] sm:$0xff]
                %370 = vst [vmem:[%s156 + $0x350] sm:$0xff] %v369
                %v371 = vld [vmem:[%s155 + $0x658] sm:$0xff]
                %372 = vst [vmem:[%s156 + $0x358] sm:$0xff] %v371
                %v373 = vld [vmem:[%s155 + $0x660] sm:$0xff]
                %374 = vst [vmem:[%s156 + $0x360] sm:$0xff] %v373
                %v375 = vld [vmem:[%s155 + $0x668] sm:$0xff]
                %376 = vst [vmem:[%s156 + $0x368] sm:$0xff] %v375
                %v377 = vld [vmem:[%s155 + $0x670] sm:$0xff]
                %378 = vst [vmem:[%s156 + $0x370] sm:$0xff] %v377
                %v379 = vld [vmem:[%s155 + $0x678] sm:$0xff]
                %380 = vst [vmem:[%s156 + $0x378] sm:$0xff] %v379
                %v381 = vld [vmem:[%s155 + $0x680] sm:$0xff]
                %382 = vst [vmem:[%s156 + $0x380] sm:$0xff] %v381
                %v383 = vld [vmem:[%s155 + $0x688] sm:$0xff]
                %384 = vst [vmem:[%s156 + $0x388] sm:$0xff] %v383
                %v385 = vld [vmem:[%s155 + $0x690] sm:$0xff]
                %386 = vst [vmem:[%s156 + $0x390] sm:$0xff] %v385
                %v387 = vld [vmem:[%s155 + $0x698] sm:$0xff]
                %388 = vst [vmem:[%s156 + $0x398] sm:$0xff] %v387
                %v389 = vld [vmem:[%s155 + $0x6a0] sm:$0xff]
                %390 = vst [vmem:[%s156 + $0x3a0] sm:$0xff] %v389
                %v391 = vld [vmem:[%s155 + $0x6a8] sm:$0xff]
                %392 = vst [vmem:[%s156 + $0x3a8] sm:$0xff] %v391
                %v393 = vld [vmem:[%s155 + $0x6b0] sm:$0xff]
                %394 = vst [vmem:[%s156 + $0x3b0] sm:$0xff] %v393
                %v395 = vld [vmem:[%s155 + $0x6b8] sm:$0xff]
                %396 = vst [vmem:[%s156 + $0x3b8] sm:$0xff] %v395
                %v397 = vld [vmem:[%s155 + $0x780] sm:$0xff]
                %398 = vst [vmem:[%s156 + $0x3c0] sm:$0xff] %v397
                %v399 = vld [vmem:[%s155 + $0x788] sm:$0xff]
                %400 = vst [vmem:[%s156 + $0x3c8] sm:$0xff] %v399
                %v401 = vld [vmem:[%s155 + $0x790] sm:$0xff]
                %402 = vst [vmem:[%s156 + $0x3d0] sm:$0xff] %v401
                %v403 = vld [vmem:[%s155 + $0x798] sm:$0xff]
                %404 = vst [vmem:[%s156 + $0x3d8] sm:$0xff] %v403
                %v405 = vld [vmem:[%s155 + $0x7a0] sm:$0xff]
                %406 = vst [vmem:[%s156 + $0x3e0] sm:$0xff] %v405
                %v407 = vld [vmem:[%s155 + $0x7a8] sm:$0xff]
                %408 = vst [vmem:[%s156 + $0x3e8] sm:$0xff] %v407
                %v409 = vld [vmem:[%s155 + $0x7b0] sm:$0xff]
                %410 = vst [vmem:[%s156 + $0x3f0] sm:$0xff] %v409
                %v411 = vld [vmem:[%s155 + $0x7b8] sm:$0xff]
                %412 = vst [vmem:[%s156 + $0x3f8] sm:$0xff] %v411
                %v413 = vld [vmem:[%s155 + $0x7c0] sm:$0xff]
                %414 = vst [vmem:[%s156 + $0x400] sm:$0xff] %v413
                %v415 = vld [vmem:[%s155 + $0x7c8] sm:$0xff]
                %416 = vst [vmem:[%s156 + $0x408] sm:$0xff] %v415
                %v417 = vld [vmem:[%s155 + $0x7d0] sm:$0xff]
                %418 = vst [vmem:[%s156 + $0x410] sm:$0xff] %v417
                %v419 = vld [vmem:[%s155 + $0x7d8] sm:$0xff]
                %420 = vst [vmem:[%s156 + $0x418] sm:$0xff] %v419
                %v421 = vld [vmem:[%s155 + $0x7e0] sm:$0xff]
                %422 = vst [vmem:[%s156 + $0x420] sm:$0xff] %v421
                %v423 = vld [vmem:[%s155 + $0x7e8] sm:$0xff]
                %424 = vst [vmem:[%s156 + $0x428] sm:$0xff] %v423
                %v425 = vld [vmem:[%s155 + $0x7f0] sm:$0xff]
                %426 = vst [vmem:[%s156 + $0x430] sm:$0xff] %v425
                %v427 = vld [vmem:[%s155 + $0x7f8] sm:$0xff]
                %428 = vst [vmem:[%s156 + $0x438] sm:$0xff] %v427
                %v429 = vld [vmem:[%s155 + $0x800] sm:$0xff]
                %430 = vst [vmem:[%s156 + $0x440] sm:$0xff] %v429
                %v431 = vld [vmem:[%s155 + $0x808] sm:$0xff]
                %432 = vst [vmem:[%s156 + $0x448] sm:$0xff] %v431
                %v433 = vld [vmem:[%s155 + $0x810] sm:$0xff]
                %434 = vst [vmem:[%s156 + $0x450] sm:$0xff] %v433
                %v435 = vld [vmem:[%s155 + $0x818] sm:$0xff]
                %436 = vst [vmem:[%s156 + $0x458] sm:$0xff] %v435
                %v437 = vld [vmem:[%s155 + $0x820] sm:$0xff]
                %438 = vst [vmem:[%s156 + $0x460] sm:$0xff] %v437
                %v439 = vld [vmem:[%s155 + $0x828] sm:$0xff]
                %440 = vst [vmem:[%s156 + $0x468] sm:$0xff] %v439
                %v441 = vld [vmem:[%s155 + $0x830] sm:$0xff]
                %442 = vst [vmem:[%s156 + $0x470] sm:$0xff] %v441
                %v443 = vld [vmem:[%s155 + $0x838] sm:$0xff]
                %444 = vst [vmem:[%s156 + $0x478] sm:$0xff] %v443
                %v445 = vld [vmem:[%s155 + $0x900] sm:$0xff]
                %446 = vst [vmem:[%s156 + $0x480] sm:$0xff] %v445
                %v447 = vld [vmem:[%s155 + $0x908] sm:$0xff]
                %448 = vst [vmem:[%s156 + $0x488] sm:$0xff] %v447
                %v449 = vld [vmem:[%s155 + $0x910] sm:$0xff]
                %450 = vst [vmem:[%s156 + $0x490] sm:$0xff] %v449
                %v451 = vld [vmem:[%s155 + $0x918] sm:$0xff]
                %452 = vst [vmem:[%s156 + $0x498] sm:$0xff] %v451
                %v453 = vld [vmem:[%s155 + $0x920] sm:$0xff]
                %454 = vst [vmem:[%s156 + $0x4a0] sm:$0xff] %v453
                %v455 = vld [vmem:[%s155 + $0x928] sm:$0xff]
                %456 = vst [vmem:[%s156 + $0x4a8] sm:$0xff] %v455
                %v457 = vld [vmem:[%s155 + $0x930] sm:$0xff]
                %458 = vst [vmem:[%s156 + $0x4b0] sm:$0xff] %v457
                %v459 = vld [vmem:[%s155 + $0x938] sm:$0xff]
                %460 = vst [vmem:[%s156 + $0x4b8] sm:$0xff] %v459
                %v461 = vld [vmem:[%s155 + $0x940] sm:$0xff]
                %462 = vst [vmem:[%s156 + $0x4c0] sm:$0xff] %v461
                %v463 = vld [vmem:[%s155 + $0x948] sm:$0xff]
                %464 = vst [vmem:[%s156 + $0x4c8] sm:$0xff] %v463
                %v465 = vld [vmem:[%s155 + $0x950] sm:$0xff]
                %466 = vst [vmem:[%s156 + $0x4d0] sm:$0xff] %v465
                %v467 = vld [vmem:[%s155 + $0x958] sm:$0xff]
                %468 = vst [vmem:[%s156 + $0x4d8] sm:$0xff] %v467
                %v469 = vld [vmem:[%s155 + $0x960] sm:$0xff]
                %470 = vst [vmem:[%s156 + $0x4e0] sm:$0xff] %v469
                %v471 = vld [vmem:[%s155 + $0x968] sm:$0xff]
                %472 = vst [vmem:[%s156 + $0x4e8] sm:$0xff] %v471
                %v473 = vld [vmem:[%s155 + $0x970] sm:$0xff]
                %474 = vst [vmem:[%s156 + $0x4f0] sm:$0xff] %v473
                %v475 = vld [vmem:[%s155 + $0x978] sm:$0xff]
                %476 = vst [vmem:[%s156 + $0x4f8] sm:$0xff] %v475
                %v477 = vld [vmem:[%s155 + $0x980] sm:$0xff]
                %478 = vst [vmem:[%s156 + $0x500] sm:$0xff] %v477
                %v479 = vld [vmem:[%s155 + $0x988] sm:$0xff]
                %480 = vst [vmem:[%s156 + $0x508] sm:$0xff] %v479
                %v481 = vld [vmem:[%s155 + $0x990] sm:$0xff]
                %482 = vst [vmem:[%s156 + $0x510] sm:$0xff] %v481
                %v483 = vld [vmem:[%s155 + $0x998] sm:$0xff]
                %484 = vst [vmem:[%s156 + $0x518] sm:$0xff] %v483
                %v485 = vld [vmem:[%s155 + $0x9a0] sm:$0xff]
                %486 = vst [vmem:[%s156 + $0x520] sm:$0xff] %v485
                %v487 = vld [vmem:[%s155 + $0x9a8] sm:$0xff]
                %488 = vst [vmem:[%s156 + $0x528] sm:$0xff] %v487
                %v489 = vld [vmem:[%s155 + $0x9b0] sm:$0xff]
                %490 = vst [vmem:[%s156 + $0x530] sm:$0xff] %v489
                %v491 = vld [vmem:[%s155 + $0x9b8] sm:$0xff]
                %492 = vst [vmem:[%s156 + $0x538] sm:$0xff] %v491
                %v493 = vld [vmem:[%s155 + $0xa80] sm:$0xff]
                %494 = vst [vmem:[%s156 + $0x540] sm:$0xff] %v493
                %v495 = vld [vmem:[%s155 + $0xa88] sm:$0xff]
                %496 = vst [vmem:[%s156 + $0x548] sm:$0xff] %v495
                %v497 = vld [vmem:[%s155 + $0xa90] sm:$0xff]
                %498 = vst [vmem:[%s156 + $0x550] sm:$0xff] %v497
                %v499 = vld [vmem:[%s155 + $0xa98] sm:$0xff]
                %500 = vst [vmem:[%s156 + $0x558] sm:$0xff] %v499
                %v501 = vld [vmem:[%s155 + $0xaa0] sm:$0xff]
                %502 = vst [vmem:[%s156 + $0x560] sm:$0xff] %v501
                %v503 = vld [vmem:[%s155 + $0xaa8] sm:$0xff]
                %504 = vst [vmem:[%s156 + $0x568] sm:$0xff] %v503
                %v505 = vld [vmem:[%s155 + $0xab0] sm:$0xff]
                %506 = vst [vmem:[%s156 + $0x570] sm:$0xff] %v505
                %v507 = vld [vmem:[%s155 + $0xab8] sm:$0xff]
                %508 = vst [vmem:[%s156 + $0x578] sm:$0xff] %v507
                %v509 = vld [vmem:[%s155 + $0xac0] sm:$0xff]
                %510 = vst [vmem:[%s156 + $0x580] sm:$0xff] %v509
                %v511 = vld [vmem:[%s155 + $0xac8] sm:$0xff]
                %512 = vst [vmem:[%s156 + $0x588] sm:$0xff] %v511
                %v513 = vld [vmem:[%s155 + $0xad0] sm:$0xff]
                %514 = vst [vmem:[%s156 + $0x590] sm:$0xff] %v513
                %v515 = vld [vmem:[%s155 + $0xad8] sm:$0xff]
                %516 = vst [vmem:[%s156 + $0x598] sm:$0xff] %v515
                %v517 = vld [vmem:[%s155 + $0xae0] sm:$0xff]
                %518 = vst [vmem:[%s156 + $0x5a0] sm:$0xff] %v517
                %v519 = vld [vmem:[%s155 + $0xae8] sm:$0xff]
                %520 = vst [vmem:[%s156 + $0x5a8] sm:$0xff] %v519
                %v521 = vld [vmem:[%s155 + $0xaf0] sm:$0xff]
                %522 = vst [vmem:[%s156 + $0x5b0] sm:$0xff] %v521
                %v523 = vld [vmem:[%s155 + $0xaf8] sm:$0xff]
                %524 = vst [vmem:[%s156 + $0x5b8] sm:$0xff] %v523
                %v525 = vld [vmem:[%s155 + $0xb00] sm:$0xff]
                %526 = vst [vmem:[%s156 + $0x5c0] sm:$0xff] %v525
                %v527 = vld [vmem:[%s155 + $0xb08] sm:$0xff]
                %528 = vst [vmem:[%s156 + $0x5c8] sm:$0xff] %v527
                %v529 = vld [vmem:[%s155 + $0xb10] sm:$0xff]
                %530 = vst [vmem:[%s156 + $0x5d0] sm:$0xff] %v529
                %v531 = vld [vmem:[%s155 + $0xb18] sm:$0xff]
                %532 = vst [vmem:[%s156 + $0x5d8] sm:$0xff] %v531
                %v533 = vld [vmem:[%s155 + $0xb20] sm:$0xff]
                %534 = vst [vmem:[%s156 + $0x5e0] sm:$0xff] %v533
                %v535 = vld [vmem:[%s155 + $0xb28] sm:$0xff]
                %536 = vst [vmem:[%s156 + $0x5e8] sm:$0xff] %v535
                %v537 = vld [vmem:[%s155 + $0xb30] sm:$0xff]
                %538 = vst [vmem:[%s156 + $0x5f0] sm:$0xff] %v537
                %v539 = vld [vmem:[%s155 + $0xb38] sm:$0xff]
                %540 = vst [vmem:[%s156 + $0x5f8] sm:$0xff] %v539
              $region41: #{mem_forward.3} parent=35 // loop_footer
                %s154 = sadd.s32 1, %s150
              $region42: #{mem_forward.3} parent=35 // loop_footer_branch
                %149 = sbr.rel target = $region38
              $region43: #{mem_forward.3} parent=35 // loop_exit
                _
            $region36: #{mem_forward.3} parent=27 // pred_fallthru
              _
          $region28: #{mem_forward.3} parent=23 // pred_fallthru
            _
          %937 = vnop
        $region24: #{mem_forward.3} parent=19 // pred_fallthru
          _
      $region20: #{mem_forward.3} parent=5 // pred_fallthru
        _
      %p938 = scmp.le.s32.totalorder 1, %s11
      %p939 = scmp.lt.s32.totalorder %s11, 3
      %p940 = pnand %p938, %p939
      %p941 = pneg %p940
      // Predicated region
      $region59: #{mem_forward.3} parent=5 // pred_check
        _
      $region60: #{mem_forward.3} parent=5 // pred_check_branch
        %943 = sbr.rel (%p940) target = $region62
      $region61: #{mem_forward.3} parent=5 // pred_region
        %s944 = ssub.s32 %s11, 1
        %s945 = sand.u32 %s64, 1
        %s946 = sand.u32 %s64, 1
        %s947 = smul.addr %s946, 1536
        %s948 = scalar_lea.vmem [#allocation2], %s947
        // Predicated region
        $region63: #{mem_forward.3} parent=61 // pred_check
          %p949 = pneg %p77
        $region64: #{mem_forward.3} parent=61 // pred_check_branch
          %951 = sbr.rel (%p949) target = $region66
        $region65: #{mem_forward.3} parent=61 // pred_region
          _
        $region66: #{mem_forward.3} parent=61 // pred_fallthru
          _
        %p952 = scmp.lt.s32.totalorder %s21, 0
        %s953 = scalar_select %p952, %s21, 0
        %s954 = smul.addr %s953, 8
        %s955 = scalar_lea.vmem %s0, %s954
        %p956 = pneg %p49
        %p957 = pneg %p46
        %s958 = sand.u32 %s64, 1
        %s959 = sand.u32 %s64, 1
        %s960 = smul.addr %s959, 1536
        %s961 = scalar_lea.vmem [#allocation2], %s960
        %p962 = pneg %p77
        %p963 = pneg %p74
        %p964 = pneg %p103
        %p965 = pneg %p100
        %s966 = sand.u32 %s90, 1
        %s967 = scalar_lea.sflag [#allocation4], %s966
        %s968 = sand.u32 %s90, 1
        %s969 = smul.addr %s968, 192
        %s970 = scalar_lea.vmem [#allocation3], %s969
        %p971 = scmp.lt.s32.totalorder %s21, 0
        %s972 = scalar_select %p971, %s21, 0
        %s973 = smul.addr %s972, 8
        %s974 = scalar_lea.vmem %s0, %s973
        %s975 = smul.u32 8, %s21
        %s976 = smul.u32 24, %s20
        %s977 = smul.u32 24, %s20
        %p978 = scmp.eq.s32.totalorder %s21, 0
        // Predicated region
        $region67: #{mem_forward.3} parent=61 // pred_check
          %p979 = pneg %p978
        $region68: #{mem_forward.3} parent=61 // pred_check_branch
          %981 = sbr.rel (%p979) target = $region70
        $region69: #{mem_forward.3} parent=61 // pred_region
          %982 = vst [vmem:[%s970] sm:$0xff] 0.0
          %983 = vst [vmem:[%s970 + $0x8] sm:$0xff] 0.0
          %984 = vst [vmem:[%s970 + $0x10] sm:$0xff] 0.0
          %985 = vst [vmem:[%s970 + $0x18] sm:$0xff] 0.0
          %986 = vst [vmem:[%s970 + $0x20] sm:$0xff] 0.0
          %987 = vst [vmem:[%s970 + $0x28] sm:$0xff] 0.0
          %988 = vst [vmem:[%s970 + $0x30] sm:$0xff] 0.0
          %989 = vst [vmem:[%s970 + $0x38] sm:$0xff] 0.0
          %990 = vst [vmem:[%s970 + $0x40] sm:$0xff] 0.0
          %991 = vst [vmem:[%s970 + $0x48] sm:$0xff] 0.0
          %992 = vst [vmem:[%s970 + $0x50] sm:$0xff] 0.0
          %993 = vst [vmem:[%s970 + $0x58] sm:$0xff] 0.0
          %994 = vst [vmem:[%s970 + $0x60] sm:$0xff] 0.0
          %995 = vst [vmem:[%s970 + $0x68] sm:$0xff] 0.0
          %996 = vst [vmem:[%s970 + $0x70] sm:$0xff] 0.0
          %997 = vst [vmem:[%s970 + $0x78] sm:$0xff] 0.0
          %998 = vst [vmem:[%s970 + $0x80] sm:$0xff] 0.0
          %999 = vst [vmem:[%s970 + $0x88] sm:$0xff] 0.0
          %1000 = vst [vmem:[%s970 + $0x90] sm:$0xff] 0.0
          %1001 = vst [vmem:[%s970 + $0x98] sm:$0xff] 0.0
          %1002 = vst [vmem:[%s970 + $0xa0] sm:$0xff] 0.0
          %1003 = vst [vmem:[%s970 + $0xa8] sm:$0xff] 0.0
          %1004 = vst [vmem:[%s970 + $0xb0] sm:$0xff] 0.0
          %1005 = vst [vmem:[%s970 + $0xb8] sm:$0xff] 0.0
        $region70: #{mem_forward.3} parent=61 // pred_fallthru
          _
        %v1006 = vld [vmem:[%s974] sm:$0xff]
        %v1007 = vld [vmem:[%s970] sm:$0xff]
        %v1008 = vld [vmem:[%s970 + $0x8] sm:$0xff]
        %v1009 = vld [vmem:[%s970 + $0x10] sm:$0xff]
        %v1010 = vld [vmem:[%s970 + $0x18] sm:$0xff]
        %v1011 = vld [vmem:[%s970 + $0x20] sm:$0xff]
        %v1012 = vld [vmem:[%s970 + $0x28] sm:$0xff]
        %v1013 = vld [vmem:[%s970 + $0x30] sm:$0xff]
        %v1014 = vld [vmem:[%s970 + $0x38] sm:$0xff]
        %v1015 = vld [vmem:[%s970 + $0x40] sm:$0xff]
        %v1016 = vld [vmem:[%s970 + $0x48] sm:$0xff]
        %v1017 = vld [vmem:[%s970 + $0x50] sm:$0xff]
        %v1018 = vld [vmem:[%s970 + $0x58] sm:$0xff]
        %v1019 = vld [vmem:[%s970 + $0x60] sm:$0xff]
        %v1020 = vld [vmem:[%s970 + $0x68] sm:$0xff]
        %v1021 = vld [vmem:[%s970 + $0x70] sm:$0xff]
        %v1022 = vld [vmem:[%s970 + $0x78] sm:$0xff]
        %v1023 = vld [vmem:[%s970 + $0x80] sm:$0xff]
        %v1024 = vld [vmem:[%s970 + $0x88] sm:$0xff]
        %v1025 = vld [vmem:[%s970 + $0x90] sm:$0xff]
        %v1026 = vld [vmem:[%s970 + $0x98] sm:$0xff]
        %v1027 = vld [vmem:[%s970 + $0xa0] sm:$0xff]
        %v1028 = vld [vmem:[%s970 + $0xa8] sm:$0xff]
        %v1029 = vld [vmem:[%s970 + $0xb0] sm:$0xff]
        %v1030 = vld [vmem:[%s970 + $0xb8] sm:$0xff]
        %v1031 = vld [vmem:[%s948] sm:$0xff]
        %v1032 = vld [vmem:[%s948 + $0x8] sm:$0xff]
        %v1033 = vld [vmem:[%s948 + $0x10] sm:$0xff]
        %v1034 = vld [vmem:[%s948 + $0x18] sm:$0xff]
        %v1035 = vld [vmem:[%s948 + $0x20] sm:$0xff]
        %v1036 = vld [vmem:[%s948 + $0x28] sm:$0xff]
        %v1037 = vld [vmem:[%s948 + $0x30] sm:$0xff]
        %v1038 = vld [vmem:[%s948 + $0x38] sm:$0xff]
        %v1039 = vld [vmem:[%s948 + $0x40] sm:$0xff]
        %v1040 = vld [vmem:[%s948 + $0x48] sm:$0xff]
        %v1041 = vld [vmem:[%s948 + $0x50] sm:$0xff]
        %v1042 = vld [vmem:[%s948 + $0x58] sm:$0xff]
        %v1043 = vld [vmem:[%s948 + $0x60] sm:$0xff]
        %v1044 = vld [vmem:[%s948 + $0x68] sm:$0xff]
        %v1045 = vld [vmem:[%s948 + $0x70] sm:$0xff]
        %v1046 = vld [vmem:[%s948 + $0x78] sm:$0xff]
        %v1047 = vld [vmem:[%s948 + $0x80] sm:$0xff]
        %v1048 = vld [vmem:[%s948 + $0x88] sm:$0xff]
        %v1049 = vld [vmem:[%s948 + $0x90] sm:$0xff]
        %v1050 = vld [vmem:[%s948 + $0x98] sm:$0xff]
        %v1051 = vld [vmem:[%s948 + $0xa0] sm:$0xff]
        %v1052 = vld [vmem:[%s948 + $0xa8] sm:$0xff]
        %v1053 = vld [vmem:[%s948 + $0xb0] sm:$0xff]
        %v1054 = vld [vmem:[%s948 + $0xb8] sm:$0xff]
        %v1055 = vld [vmem:[%s948 + $0xc0] sm:$0xff]
        %v1056 = vld [vmem:[%s948 + $0xc8] sm:$0xff]
        %v1057 = vld [vmem:[%s948 + $0xd0] sm:$0xff]
        %v1058 = vld [vmem:[%s948 + $0xd8] sm:$0xff]
        %v1059 = vld [vmem:[%s948 + $0xe0] sm:$0xff]
        %v1060 = vld [vmem:[%s948 + $0xe8] sm:$0xff]
        %v1061 = vld [vmem:[%s948 + $0xf0] sm:$0xff]
        %v1062 = vld [vmem:[%s948 + $0xf8] sm:$0xff]
        %v1063 = vld [vmem:[%s948 + $0x100] sm:$0xff]
        %v1064 = vld [vmem:[%s948 + $0x108] sm:$0xff]
        %v1065 = vld [vmem:[%s948 + $0x110] sm:$0xff]
        %v1066 = vld [vmem:[%s948 + $0x118] sm:$0xff]
        %v1067 = vld [vmem:[%s948 + $0x120] sm:$0xff]
        %v1068 = vld [vmem:[%s948 + $0x128] sm:$0xff]
        %v1069 = vld [vmem:[%s948 + $0x130] sm:$0xff]
        %v1070 = vld [vmem:[%s948 + $0x138] sm:$0xff]
        %v1071 = vld [vmem:[%s948 + $0x140] sm:$0xff]
        %v1072 = vld [vmem:[%s948 + $0x148] sm:$0xff]
        %v1073 = vld [vmem:[%s948 + $0x150] sm:$0xff]
        %v1074 = vld [vmem:[%s948 + $0x158] sm:$0xff]
        %v1075 = vld [vmem:[%s948 + $0x160] sm:$0xff]
        %v1076 = vld [vmem:[%s948 + $0x168] sm:$0xff]
        %v1077 = vld [vmem:[%s948 + $0x170] sm:$0xff]
        %v1078 = vld [vmem:[%s948 + $0x178] sm:$0xff]
        %v1079 = vld [vmem:[%s948 + $0x180] sm:$0xff]
        %v1080 = vld [vmem:[%s948 + $0x188] sm:$0xff]
        %v1081 = vld [vmem:[%s948 + $0x190] sm:$0xff]
        %v1082 = vld [vmem:[%s948 + $0x198] sm:$0xff]
        %v1083 = vld [vmem:[%s948 + $0x1a0] sm:$0xff]
        %v1084 = vld [vmem:[%s948 + $0x1a8] sm:$0xff]
        %v1085 = vld [vmem:[%s948 + $0x1b0] sm:$0xff]
        %v1086 = vld [vmem:[%s948 + $0x1b8] sm:$0xff]
        %v1087 = vld [vmem:[%s948 + $0x1c0] sm:$0xff]
        %v1088 = vld [vmem:[%s948 + $0x1c8] sm:$0xff]
        %v1089 = vld [vmem:[%s948 + $0x1d0] sm:$0xff]
        %v1090 = vld [vmem:[%s948 + $0x1d8] sm:$0xff]
        %v1091 = vld [vmem:[%s948 + $0x1e0] sm:$0xff]
        %v1092 = vld [vmem:[%s948 + $0x1e8] sm:$0xff]
        %v1093 = vld [vmem:[%s948 + $0x1f0] sm:$0xff]
        %v1094 = vld [vmem:[%s948 + $0x1f8] sm:$0xff]
        %v1095 = vld [vmem:[%s948 + $0x200] sm:$0xff]
        %v1096 = vld [vmem:[%s948 + $0x208] sm:$0xff]
        %v1097 = vld [vmem:[%s948 + $0x210] sm:$0xff]
        %v1098 = vld [vmem:[%s948 + $0x218] sm:$0xff]
        %v1099 = vld [vmem:[%s948 + $0x220] sm:$0xff]
        %v1100 = vld [vmem:[%s948 + $0x228] sm:$0xff]
        %v1101 = vld [vmem:[%s948 + $0x230] sm:$0xff]
        %v1102 = vld [vmem:[%s948 + $0x238] sm:$0xff]
        %v1103 = vld [vmem:[%s948 + $0x240] sm:$0xff]
        %v1104 = vld [vmem:[%s948 + $0x248] sm:$0xff]
        %v1105 = vld [vmem:[%s948 + $0x250] sm:$0xff]
        %v1106 = vld [vmem:[%s948 + $0x258] sm:$0xff]
        %v1107 = vld [vmem:[%s948 + $0x260] sm:$0xff]
        %v1108 = vld [vmem:[%s948 + $0x268] sm:$0xff]
        %v1109 = vld [vmem:[%s948 + $0x270] sm:$0xff]
        %v1110 = vld [vmem:[%s948 + $0x278] sm:$0xff]
        %v1111 = vld [vmem:[%s948 + $0x280] sm:$0xff]
        %v1112 = vld [vmem:[%s948 + $0x288] sm:$0xff]
        %v1113 = vld [vmem:[%s948 + $0x290] sm:$0xff]
        %v1114 = vld [vmem:[%s948 + $0x298] sm:$0xff]
        %v1115 = vld [vmem:[%s948 + $0x2a0] sm:$0xff]
        %v1116 = vld [vmem:[%s948 + $0x2a8] sm:$0xff]
        %v1117 = vld [vmem:[%s948 + $0x2b0] sm:$0xff]
        %v1118 = vld [vmem:[%s948 + $0x2b8] sm:$0xff]
        %v1119 = vld [vmem:[%s948 + $0x2c0] sm:$0xff]
        %v1120 = vld [vmem:[%s948 + $0x2c8] sm:$0xff]
        %v1121 = vld [vmem:[%s948 + $0x2d0] sm:$0xff]
        %v1122 = vld [vmem:[%s948 + $0x2d8] sm:$0xff]
        %v1123 = vld [vmem:[%s948 + $0x2e0] sm:$0xff]
        %v1124 = vld [vmem:[%s948 + $0x2e8] sm:$0xff]
        %v1125 = vld [vmem:[%s948 + $0x2f0] sm:$0xff]
        %v1126 = vld [vmem:[%s948 + $0x2f8] sm:$0xff]
        %v1127 = vld [vmem:[%s948 + $0x300] sm:$0xff]
        %v1128 = vld [vmem:[%s948 + $0x308] sm:$0xff]
        %v1129 = vld [vmem:[%s948 + $0x310] sm:$0xff]
        %v1130 = vld [vmem:[%s948 + $0x318] sm:$0xff]
        %v1131 = vld [vmem:[%s948 + $0x320] sm:$0xff]
        %v1132 = vld [vmem:[%s948 + $0x328] sm:$0xff]
        %v1133 = vld [vmem:[%s948 + $0x330] sm:$0xff]
        %v1134 = vld [vmem:[%s948 + $0x338] sm:$0xff]
        %v1135 = vld [vmem:[%s948 + $0x340] sm:$0xff]
        %v1136 = vld [vmem:[%s948 + $0x348] sm:$0xff]
        %v1137 = vld [vmem:[%s948 + $0x350] sm:$0xff]
        %v1138 = vld [vmem:[%s948 + $0x358] sm:$0xff]
        %v1139 = vld [vmem:[%s948 + $0x360] sm:$0xff]
        %v1140 = vld [vmem:[%s948 + $0x368] sm:$0xff]
        %v1141 = vld [vmem:[%s948 + $0x370] sm:$0xff]
        %v1142 = vld [vmem:[%s948 + $0x378] sm:$0xff]
        %v1143 = vld [vmem:[%s948 + $0x380] sm:$0xff]
        %v1144 = vld [vmem:[%s948 + $0x388] sm:$0xff]
        %v1145 = vld [vmem:[%s948 + $0x390] sm:$0xff]
        %v1146 = vld [vmem:[%s948 + $0x398] sm:$0xff]
        %v1147 = vld [vmem:[%s948 + $0x3a0] sm:$0xff]
        %v1148 = vld [vmem:[%s948 + $0x3a8] sm:$0xff]
        %v1149 = vld [vmem:[%s948 + $0x3b0] sm:$0xff]
        %v1150 = vld [vmem:[%s948 + $0x3b8] sm:$0xff]
        %v1151 = vld [vmem:[%s948 + $0x3c0] sm:$0xff]
        %v1152 = vld [vmem:[%s948 + $0x3c8] sm:$0xff]
        %v1153 = vld [vmem:[%s948 + $0x3d0] sm:$0xff]
        %v1154 = vld [vmem:[%s948 + $0x3d8] sm:$0xff]
        %v1155 = vld [vmem:[%s948 + $0x3e0] sm:$0xff]
        %v1156 = vld [vmem:[%s948 + $0x3e8] sm:$0xff]
        %v1157 = vld [vmem:[%s948 + $0x3f0] sm:$0xff]
        %v1158 = vld [vmem:[%s948 + $0x3f8] sm:$0xff]
        %v1159 = vld [vmem:[%s948 + $0x400] sm:$0xff]
        %v1160 = vld [vmem:[%s948 + $0x408] sm:$0xff]
        %v1161 = vld [vmem:[%s948 + $0x410] sm:$0xff]
        %v1162 = vld [vmem:[%s948 + $0x418] sm:$0xff]
        %v1163 = vld [vmem:[%s948 + $0x420] sm:$0xff]
        %v1164 = vld [vmem:[%s948 + $0x428] sm:$0xff]
        %v1165 = vld [vmem:[%s948 + $0x430] sm:$0xff]
        %v1166 = vld [vmem:[%s948 + $0x438] sm:$0xff]
        %v1167 = vld [vmem:[%s948 + $0x440] sm:$0xff]
        %v1168 = vld [vmem:[%s948 + $0x448] sm:$0xff]
        %v1169 = vld [vmem:[%s948 + $0x450] sm:$0xff]
        %v1170 = vld [vmem:[%s948 + $0x458] sm:$0xff]
        %v1171 = vld [vmem:[%s948 + $0x460] sm:$0xff]
        %v1172 = vld [vmem:[%s948 + $0x468] sm:$0xff]
        %v1173 = vld [vmem:[%s948 + $0x470] sm:$0xff]
        %v1174 = vld [vmem:[%s948 + $0x478] sm:$0xff]
        %v1175 = vld [vmem:[%s948 + $0x480] sm:$0xff]
        %v1176 = vld [vmem:[%s948 + $0x488] sm:$0xff]
        %v1177 = vld [vmem:[%s948 + $0x490] sm:$0xff]
        %v1178 = vld [vmem:[%s948 + $0x498] sm:$0xff]
        %v1179 = vld [vmem:[%s948 + $0x4a0] sm:$0xff]
        %v1180 = vld [vmem:[%s948 + $0x4a8] sm:$0xff]
        %v1181 = vld [vmem:[%s948 + $0x4b0] sm:$0xff]
        %v1182 = vld [vmem:[%s948 + $0x4b8] sm:$0xff]
        %v1183 = vld [vmem:[%s948 + $0x4c0] sm:$0xff]
        %v1184 = vld [vmem:[%s948 + $0x4c8] sm:$0xff]
        %v1185 = vld [vmem:[%s948 + $0x4d0] sm:$0xff]
        %v1186 = vld [vmem:[%s948 + $0x4d8] sm:$0xff]
        %v1187 = vld [vmem:[%s948 + $0x4e0] sm:$0xff]
        %v1188 = vld [vmem:[%s948 + $0x4e8] sm:$0xff]
        %v1189 = vld [vmem:[%s948 + $0x4f0] sm:$0xff]
        %v1190 = vld [vmem:[%s948 + $0x4f8] sm:$0xff]
        %v1191 = vld [vmem:[%s948 + $0x500] sm:$0xff]
        %v1192 = vld [vmem:[%s948 + $0x508] sm:$0xff]
        %v1193 = vld [vmem:[%s948 + $0x510] sm:$0xff]
        %v1194 = vld [vmem:[%s948 + $0x518] sm:$0xff]
        %v1195 = vld [vmem:[%s948 + $0x520] sm:$0xff]
        %v1196 = vld [vmem:[%s948 + $0x528] sm:$0xff]
        %v1197 = vld [vmem:[%s948 + $0x530] sm:$0xff]
        %v1198 = vld [vmem:[%s948 + $0x538] sm:$0xff]
        %v1199 = vld [vmem:[%s948 + $0x540] sm:$0xff]
        %v1200 = vld [vmem:[%s948 + $0x548] sm:$0xff]
        %v1201 = vld [vmem:[%s948 + $0x550] sm:$0xff]
        %v1202 = vld [vmem:[%s948 + $0x558] sm:$0xff]
        %v1203 = vld [vmem:[%s948 + $0x560] sm:$0xff]
        %v1204 = vld [vmem:[%s948 + $0x568] sm:$0xff]
        %v1205 = vld [vmem:[%s948 + $0x570] sm:$0xff]
        %v1206 = vld [vmem:[%s948 + $0x578] sm:$0xff]
        %v1207 = vld [vmem:[%s948 + $0x580] sm:$0xff]
        %v1208 = vld [vmem:[%s948 + $0x588] sm:$0xff]
        %v1209 = vld [vmem:[%s948 + $0x590] sm:$0xff]
        %v1210 = vld [vmem:[%s948 + $0x598] sm:$0xff]
        %v1211 = vld [vmem:[%s948 + $0x5a0] sm:$0xff]
        %v1212 = vld [vmem:[%s948 + $0x5a8] sm:$0xff]
        %v1213 = vld [vmem:[%s948 + $0x5b0] sm:$0xff]
        %v1214 = vld [vmem:[%s948 + $0x5b8] sm:$0xff]
        %v1215 = vld [vmem:[%s948 + $0x5c0] sm:$0xff]
        %v1216 = vld [vmem:[%s948 + $0x5c8] sm:$0xff]
        %v1217 = vld [vmem:[%s948 + $0x5d0] sm:$0xff]
        %v1218 = vld [vmem:[%s948 + $0x5d8] sm:$0xff]
        %v1219 = vld [vmem:[%s948 + $0x5e0] sm:$0xff]
        %v1220 = vld [vmem:[%s948 + $0x5e8] sm:$0xff]
        %v1221 = vld [vmem:[%s948 + $0x5f0] sm:$0xff]
        %v1222 = vld [vmem:[%s948 + $0x5f8] sm:$0xff]
        %v1224 = vcombine.high %v1006, %v1006
        %v1226 = vunpack.c.l.s4 1966171168
        %v1227 = vunpack.c.0.s8 %v1226
        %v1228 = vlaneseq
        %v1229 = vshrl.u32 %v1228, 7
        %v1230 = vsub.s32 %v1227, %v1229
        %v1231 = vrot.slane %v1006, %v1230
        %v1233 = vunpack.c.l.s4 1966171168
        %v1234 = vunpack.c.0.s8 %v1233
        %v1235 = vlaneseq
        %v1236 = vshrl.u32 %v1235, 7
        %v1237 = vsub.s32 %v1234, %v1236
        %v1238 = vrot.slane %v1224, %v1237
        %v1239 = vcombine.high %v1231, %v1231
        %v1240 = vcombine.high %v1238, %v1238
        %v1242 = vunpack.c.l.s4 1966171168
        %v1243 = vunpack.c.0.s8 %v1242
        %v1244 = vlaneseq
        %v1245 = vshrl.u32 %v1244, 7
        %v1246 = vsub.s32 %v1243, %v1245
        %v1247 = vrot.slane %v1231, %v1246
        %v1249 = vunpack.c.l.s4 1966171168
        %v1250 = vunpack.c.0.s8 %v1249
        %v1251 = vlaneseq
        %v1252 = vshrl.u32 %v1251, 7
        %v1253 = vsub.s32 %v1250, %v1252
        %v1254 = vrot.slane %v1238, %v1253
        %v1256 = vunpack.c.l.s4 1966171168
        %v1257 = vunpack.c.0.s8 %v1256
        %v1258 = vlaneseq
        %v1259 = vshrl.u32 %v1258, 7
        %v1260 = vsub.s32 %v1257, %v1259
        %v1261 = vrot.slane %v1239, %v1260
        %v1263 = vunpack.c.l.s4 1966171168
        %v1264 = vunpack.c.0.s8 %v1263
        %v1265 = vlaneseq
        %v1266 = vshrl.u32 %v1265, 7
        %v1267 = vsub.s32 %v1264, %v1266
        %v1268 = vrot.slane %v1240, %v1267
        %v1269 = vcombine.high %v1247, %v1247
        %v1270 = vcombine.high %v1254, %v1254
        %v1271 = vcombine.high %v1261, %v1261
        %v1272 = vcombine.high %v1268, %v1268
        %v1273 = vlaneseq
        %v1274 = vshrl.u32 %v1273, 7
        %v1275 = vsub.s32 0, %v1274
        %v1276 = vrot.slane %v1247, %v1275
        %v1277 = vlaneseq
        %v1278 = vshrl.u32 %v1277, 7
        %v1279 = vsub.s32 0, %v1278
        %v1280 = vrot.slane %v1261, %v1279
        %v1281 = vlaneseq
        %v1282 = vshrl.u32 %v1281, 7
        %v1283 = vsub.s32 0, %v1282
        %v1284 = vrot.slane %v1269, %v1283
        %v1285 = vlaneseq
        %v1286 = vshrl.u32 %v1285, 7
        %v1287 = vsub.s32 0, %v1286
        %v1288 = vrot.slane %v1271, %v1287
        %v1289 = vlaneseq
        %v1290 = vshrl.u32 %v1289, 7
        %v1291 = vsub.s32 0, %v1290
        %v1292 = vrot.slane %v1254, %v1291
        %v1293 = vlaneseq
        %v1294 = vshrl.u32 %v1293, 7
        %v1295 = vsub.s32 0, %v1294
        %v1296 = vrot.slane %v1268, %v1295
        %v1297 = vlaneseq
        %v1298 = vshrl.u32 %v1297, 7
        %v1299 = vsub.s32 0, %v1298
        %v1300 = vrot.slane %v1270, %v1299
        %v1301 = vlaneseq
        %v1302 = vshrl.u32 %v1301, 7
        %v1303 = vsub.s32 0, %v1302
        %v1304 = vrot.slane %v1272, %v1303
        %1305 = vset.pattern.permute.xlu0 0
        %1306 = vperm.xlu0 %1305, %v1276
        %v1307 = vpop.permute.xlu0 %1306
        %1309 = vset.pattern.permute.xlu0 0
        %1310 = vperm.xlu0 %1309, %v1280
        %v1311 = vpop.permute.xlu0 %1310
        %1313 = vset.pattern.permute.xlu0 0
        %1314 = vperm.xlu0 %1313, %v1284
        %v1315 = vpop.permute.xlu0 %1314
        %1317 = vset.pattern.permute.xlu0 0
        %1318 = vperm.xlu0 %1317, %v1288
        %v1319 = vpop.permute.xlu0 %1318
        %1321 = vset.pattern.permute.xlu0 0
        %1322 = vperm.xlu0 %1321, %v1292
        %v1323 = vpop.permute.xlu0 %1322
        %1325 = vset.pattern.permute.xlu0 0
        %1326 = vperm.xlu0 %1325, %v1296
        %v1327 = vpop.permute.xlu0 %1326
        %1329 = vset.pattern.permute.xlu0 0
        %1330 = vperm.xlu0 %1329, %v1300
        %v1331 = vpop.permute.xlu0 %1330
        %1333 = vset.pattern.permute.xlu0 0
        %1334 = vperm.xlu0 %1333, %v1304
        %v1335 = vpop.permute.xlu0 %1334
        %v1337 = vmul.f32 %v1031, %v1307
        %v1338 = vmul.f32 %v1032, %v1307
        %v1339 = vmul.f32 %v1033, %v1307
        %v1340 = vmul.f32 %v1034, %v1307
        %v1341 = vmul.f32 %v1035, %v1307
        %v1342 = vmul.f32 %v1036, %v1307
        %v1343 = vmul.f32 %v1037, %v1307
        %v1344 = vmul.f32 %v1038, %v1307
        %v1345 = vmul.f32 %v1039, %v1307
        %v1346 = vmul.f32 %v1040, %v1307
        %v1347 = vmul.f32 %v1041, %v1307
        %v1348 = vmul.f32 %v1042, %v1307
        %v1349 = vmul.f32 %v1043, %v1307
        %v1350 = vmul.f32 %v1044, %v1307
        %v1351 = vmul.f32 %v1045, %v1307
        %v1352 = vmul.f32 %v1046, %v1307
        %v1353 = vmul.f32 %v1047, %v1307
        %v1354 = vmul.f32 %v1048, %v1307
        %v1355 = vmul.f32 %v1049, %v1307
        %v1356 = vmul.f32 %v1050, %v1307
        %v1357 = vmul.f32 %v1051, %v1307
        %v1358 = vmul.f32 %v1052, %v1307
        %v1359 = vmul.f32 %v1053, %v1307
        %v1360 = vmul.f32 %v1054, %v1307
        %v1361 = vmul.f32 %v1055, %v1311
        %v1362 = vmul.f32 %v1056, %v1311
        %v1363 = vmul.f32 %v1057, %v1311
        %v1364 = vmul.f32 %v1058, %v1311
        %v1365 = vmul.f32 %v1059, %v1311
        %v1366 = vmul.f32 %v1060, %v1311
        %v1367 = vmul.f32 %v1061, %v1311
        %v1368 = vmul.f32 %v1062, %v1311
        %v1369 = vmul.f32 %v1063, %v1311
        %v1370 = vmul.f32 %v1064, %v1311
        %v1371 = vmul.f32 %v1065, %v1311
        %v1372 = vmul.f32 %v1066, %v1311
        %v1373 = vmul.f32 %v1067, %v1311
        %v1374 = vmul.f32 %v1068, %v1311
        %v1375 = vmul.f32 %v1069, %v1311
        %v1376 = vmul.f32 %v1070, %v1311
        %v1377 = vmul.f32 %v1071, %v1311
        %v1378 = vmul.f32 %v1072, %v1311
        %v1379 = vmul.f32 %v1073, %v1311
        %v1380 = vmul.f32 %v1074, %v1311
        %v1381 = vmul.f32 %v1075, %v1311
        %v1382 = vmul.f32 %v1076, %v1311
        %v1383 = vmul.f32 %v1077, %v1311
        %v1384 = vmul.f32 %v1078, %v1311
        %v1385 = vmul.f32 %v1079, %v1315
        %v1386 = vmul.f32 %v1080, %v1315
        %v1387 = vmul.f32 %v1081, %v1315
        %v1388 = vmul.f32 %v1082, %v1315
        %v1389 = vmul.f32 %v1083, %v1315
        %v1390 = vmul.f32 %v1084, %v1315
        %v1391 = vmul.f32 %v1085, %v1315
        %v1392 = vmul.f32 %v1086, %v1315
        %v1393 = vmul.f32 %v1087, %v1315
        %v1394 = vmul.f32 %v1088, %v1315
        %v1395 = vmul.f32 %v1089, %v1315
        %v1396 = vmul.f32 %v1090, %v1315
        %v1397 = vmul.f32 %v1091, %v1315
        %v1398 = vmul.f32 %v1092, %v1315
        %v1399 = vmul.f32 %v1093, %v1315
        %v1400 = vmul.f32 %v1094, %v1315
        %v1401 = vmul.f32 %v1095, %v1315
        %v1402 = vmul.f32 %v1096, %v1315
        %v1403 = vmul.f32 %v1097, %v1315
        %v1404 = vmul.f32 %v1098, %v1315
        %v1405 = vmul.f32 %v1099, %v1315
        %v1406 = vmul.f32 %v1100, %v1315
        %v1407 = vmul.f32 %v1101, %v1315
        %v1408 = vmul.f32 %v1102, %v1315
        %v1409 = vmul.f32 %v1103, %v1319
        %v1410 = vmul.f32 %v1104, %v1319
        %v1411 = vmul.f32 %v1105, %v1319
        %v1412 = vmul.f32 %v1106, %v1319
        %v1413 = vmul.f32 %v1107, %v1319
        %v1414 = vmul.f32 %v1108, %v1319
        %v1415 = vmul.f32 %v1109, %v1319
        %v1416 = vmul.f32 %v1110, %v1319
        %v1417 = vmul.f32 %v1111, %v1319
        %v1418 = vmul.f32 %v1112, %v1319
        %v1419 = vmul.f32 %v1113, %v1319
        %v1420 = vmul.f32 %v1114, %v1319
        %v1421 = vmul.f32 %v1115, %v1319
        %v1422 = vmul.f32 %v1116, %v1319
        %v1423 = vmul.f32 %v1117, %v1319
        %v1424 = vmul.f32 %v1118, %v1319
        %v1425 = vmul.f32 %v1119, %v1319
        %v1426 = vmul.f32 %v1120, %v1319
        %v1427 = vmul.f32 %v1121, %v1319
        %v1428 = vmul.f32 %v1122, %v1319
        %v1429 = vmul.f32 %v1123, %v1319
        %v1430 = vmul.f32 %v1124, %v1319
        %v1431 = vmul.f32 %v1125, %v1319
        %v1432 = vmul.f32 %v1126, %v1319
        %v1433 = vmul.f32 %v1127, %v1323
        %v1434 = vmul.f32 %v1128, %v1323
        %v1435 = vmul.f32 %v1129, %v1323
        %v1436 = vmul.f32 %v1130, %v1323
        %v1437 = vmul.f32 %v1131, %v1323
        %v1438 = vmul.f32 %v1132, %v1323
        %v1439 = vmul.f32 %v1133, %v1323
        %v1440 = vmul.f32 %v1134, %v1323
        %v1441 = vmul.f32 %v1135, %v1323
        %v1442 = vmul.f32 %v1136, %v1323
        %v1443 = vmul.f32 %v1137, %v1323
        %v1444 = vmul.f32 %v1138, %v1323
        %v1445 = vmul.f32 %v1139, %v1323
        %v1446 = vmul.f32 %v1140, %v1323
        %v1447 = vmul.f32 %v1141, %v1323
        %v1448 = vmul.f32 %v1142, %v1323
        %v1449 = vmul.f32 %v1143, %v1323
        %v1450 = vmul.f32 %v1144, %v1323
        %v1451 = vmul.f32 %v1145, %v1323
        %v1452 = vmul.f32 %v1146, %v1323
        %v1453 = vmul.f32 %v1147, %v1323
        %v1454 = vmul.f32 %v1148, %v1323
        %v1455 = vmul.f32 %v1149, %v1323
        %v1456 = vmul.f32 %v1150, %v1323
        %v1457 = vmul.f32 %v1151, %v1327
        %v1458 = vmul.f32 %v1152, %v1327
        %v1459 = vmul.f32 %v1153, %v1327
        %v1460 = vmul.f32 %v1154, %v1327
        %v1461 = vmul.f32 %v1155, %v1327
        %v1462 = vmul.f32 %v1156, %v1327
        %v1463 = vmul.f32 %v1157, %v1327
        %v1464 = vmul.f32 %v1158, %v1327
        %v1465 = vmul.f32 %v1159, %v1327
        %v1466 = vmul.f32 %v1160, %v1327
        %v1467 = vmul.f32 %v1161, %v1327
        %v1468 = vmul.f32 %v1162, %v1327
        %v1469 = vmul.f32 %v1163, %v1327
        %v1470 = vmul.f32 %v1164, %v1327
        %v1471 = vmul.f32 %v1165, %v1327
        %v1472 = vmul.f32 %v1166, %v1327
        %v1473 = vmul.f32 %v1167, %v1327
        %v1474 = vmul.f32 %v1168, %v1327
        %v1475 = vmul.f32 %v1169, %v1327
        %v1476 = vmul.f32 %v1170, %v1327
        %v1477 = vmul.f32 %v1171, %v1327
        %v1478 = vmul.f32 %v1172, %v1327
        %v1479 = vmul.f32 %v1173, %v1327
        %v1480 = vmul.f32 %v1174, %v1327
        %v1481 = vmul.f32 %v1175, %v1331
        %v1482 = vmul.f32 %v1176, %v1331
        %v1483 = vmul.f32 %v1177, %v1331
        %v1484 = vmul.f32 %v1178, %v1331
        %v1485 = vmul.f32 %v1179, %v1331
        %v1486 = vmul.f32 %v1180, %v1331
        %v1487 = vmul.f32 %v1181, %v1331
        %v1488 = vmul.f32 %v1182, %v1331
        %v1489 = vmul.f32 %v1183, %v1331
        %v1490 = vmul.f32 %v1184, %v1331
        %v1491 = vmul.f32 %v1185, %v1331
        %v1492 = vmul.f32 %v1186, %v1331
        %v1493 = vmul.f32 %v1187, %v1331
        %v1494 = vmul.f32 %v1188, %v1331
        %v1495 = vmul.f32 %v1189, %v1331
        %v1496 = vmul.f32 %v1190, %v1331
        %v1497 = vmul.f32 %v1191, %v1331
        %v1498 = vmul.f32 %v1192, %v1331
        %v1499 = vmul.f32 %v1193, %v1331
        %v1500 = vmul.f32 %v1194, %v1331
        %v1501 = vmul.f32 %v1195, %v1331
        %v1502 = vmul.f32 %v1196, %v1331
        %v1503 = vmul.f32 %v1197, %v1331
        %v1504 = vmul.f32 %v1198, %v1331
        %v1505 = vmul.f32 %v1199, %v1335
        %v1506 = vmul.f32 %v1200, %v1335
        %v1507 = vmul.f32 %v1201, %v1335
        %v1508 = vmul.f32 %v1202, %v1335
        %v1509 = vmul.f32 %v1203, %v1335
        %v1510 = vmul.f32 %v1204, %v1335
        %v1511 = vmul.f32 %v1205, %v1335
        %v1512 = vmul.f32 %v1206, %v1335
        %v1513 = vmul.f32 %v1207, %v1335
        %v1514 = vmul.f32 %v1208, %v1335
        %v1515 = vmul.f32 %v1209, %v1335
        %v1516 = vmul.f32 %v1210, %v1335
        %v1517 = vmul.f32 %v1211, %v1335
        %v1518 = vmul.f32 %v1212, %v1335
        %v1519 = vmul.f32 %v1213, %v1335
        %v1520 = vmul.f32 %v1214, %v1335
        %v1521 = vmul.f32 %v1215, %v1335
        %v1522 = vmul.f32 %v1216, %v1335
        %v1523 = vmul.f32 %v1217, %v1335
        %v1524 = vmul.f32 %v1218, %v1335
        %v1525 = vmul.f32 %v1219, %v1335
        %v1526 = vmul.f32 %v1220, %v1335
        %v1527 = vmul.f32 %v1221, %v1335
        %v1528 = vmul.f32 %v1222, %v1335
        %v1529 = vadd.f32 %v1337, %v1361
        %v1530 = vadd.f32 %v1529, %v1385
        %v1531 = vadd.f32 %v1530, %v1409
        %v1532 = vadd.f32 %v1531, %v1433
        %v1533 = vadd.f32 %v1532, %v1457
        %v1534 = vadd.f32 %v1533, %v1481
        %v1535 = vadd.f32 %v1534, %v1505
        %v1536 = vadd.f32 %v1338, %v1362
        %v1537 = vadd.f32 %v1536, %v1386
        %v1538 = vadd.f32 %v1537, %v1410
        %v1539 = vadd.f32 %v1538, %v1434
        %v1540 = vadd.f32 %v1539, %v1458
        %v1541 = vadd.f32 %v1540, %v1482
        %v1542 = vadd.f32 %v1541, %v1506
        %v1543 = vadd.f32 %v1339, %v1363
        %v1544 = vadd.f32 %v1543, %v1387
        %v1545 = vadd.f32 %v1544, %v1411
        %v1546 = vadd.f32 %v1545, %v1435
        %v1547 = vadd.f32 %v1546, %v1459
        %v1548 = vadd.f32 %v1547, %v1483
        %v1549 = vadd.f32 %v1548, %v1507
        %v1550 = vadd.f32 %v1340, %v1364
        %v1551 = vadd.f32 %v1550, %v1388
        %v1552 = vadd.f32 %v1551, %v1412
        %v1553 = vadd.f32 %v1552, %v1436
        %v1554 = vadd.f32 %v1553, %v1460
        %v1555 = vadd.f32 %v1554, %v1484
        %v1556 = vadd.f32 %v1555, %v1508
        %v1557 = vadd.f32 %v1341, %v1365
        %v1558 = vadd.f32 %v1557, %v1389
        %v1559 = vadd.f32 %v1558, %v1413
        %v1560 = vadd.f32 %v1559, %v1437
        %v1561 = vadd.f32 %v1560, %v1461
        %v1562 = vadd.f32 %v1561, %v1485
        %v1563 = vadd.f32 %v1562, %v1509
        %v1564 = vadd.f32 %v1342, %v1366
        %v1565 = vadd.f32 %v1564, %v1390
        %v1566 = vadd.f32 %v1565, %v1414
        %v1567 = vadd.f32 %v1566, %v1438
        %v1568 = vadd.f32 %v1567, %v1462
        %v1569 = vadd.f32 %v1568, %v1486
        %v1570 = vadd.f32 %v1569, %v1510
        %v1571 = vadd.f32 %v1343, %v1367
        %v1572 = vadd.f32 %v1571, %v1391
        %v1573 = vadd.f32 %v1572, %v1415
        %v1574 = vadd.f32 %v1573, %v1439
        %v1575 = vadd.f32 %v1574, %v1463
        %v1576 = vadd.f32 %v1575, %v1487
        %v1577 = vadd.f32 %v1576, %v1511
        %v1578 = vadd.f32 %v1344, %v1368
        %v1579 = vadd.f32 %v1578, %v1392
        %v1580 = vadd.f32 %v1579, %v1416
        %v1581 = vadd.f32 %v1580, %v1440
        %v1582 = vadd.f32 %v1581, %v1464
        %v1583 = vadd.f32 %v1582, %v1488
        %v1584 = vadd.f32 %v1583, %v1512
        %v1585 = vadd.f32 %v1345, %v1369
        %v1586 = vadd.f32 %v1585, %v1393
        %v1587 = vadd.f32 %v1586, %v1417
        %v1588 = vadd.f32 %v1587, %v1441
        %v1589 = vadd.f32 %v1588, %v1465
        %v1590 = vadd.f32 %v1589, %v1489
        %v1591 = vadd.f32 %v1590, %v1513
        %v1592 = vadd.f32 %v1346, %v1370
        %v1593 = vadd.f32 %v1592, %v1394
        %v1594 = vadd.f32 %v1593, %v1418
        %v1595 = vadd.f32 %v1594, %v1442
        %v1596 = vadd.f32 %v1595, %v1466
        %v1597 = vadd.f32 %v1596, %v1490
        %v1598 = vadd.f32 %v1597, %v1514
        %v1599 = vadd.f32 %v1347, %v1371
        %v1600 = vadd.f32 %v1599, %v1395
        %v1601 = vadd.f32 %v1600, %v1419
        %v1602 = vadd.f32 %v1601, %v1443
        %v1603 = vadd.f32 %v1602, %v1467
        %v1604 = vadd.f32 %v1603, %v1491
        %v1605 = vadd.f32 %v1604, %v1515
        %v1606 = vadd.f32 %v1348, %v1372
        %v1607 = vadd.f32 %v1606, %v1396
        %v1608 = vadd.f32 %v1607, %v1420
        %v1609 = vadd.f32 %v1608, %v1444
        %v1610 = vadd.f32 %v1609, %v1468
        %v1611 = vadd.f32 %v1610, %v1492
        %v1612 = vadd.f32 %v1611, %v1516
        %v1613 = vadd.f32 %v1349, %v1373
        %v1614 = vadd.f32 %v1613, %v1397
        %v1615 = vadd.f32 %v1614, %v1421
        %v1616 = vadd.f32 %v1615, %v1445
        %v1617 = vadd.f32 %v1616, %v1469
        %v1618 = vadd.f32 %v1617, %v1493
        %v1619 = vadd.f32 %v1618, %v1517
        %v1620 = vadd.f32 %v1350, %v1374
        %v1621 = vadd.f32 %v1620, %v1398
        %v1622 = vadd.f32 %v1621, %v1422
        %v1623 = vadd.f32 %v1622, %v1446
        %v1624 = vadd.f32 %v1623, %v1470
        %v1625 = vadd.f32 %v1624, %v1494
        %v1626 = vadd.f32 %v1625, %v1518
        %v1627 = vadd.f32 %v1351, %v1375
        %v1628 = vadd.f32 %v1627, %v1399
        %v1629 = vadd.f32 %v1628, %v1423
        %v1630 = vadd.f32 %v1629, %v1447
        %v1631 = vadd.f32 %v1630, %v1471
        %v1632 = vadd.f32 %v1631, %v1495
        %v1633 = vadd.f32 %v1632, %v1519
        %v1634 = vadd.f32 %v1352, %v1376
        %v1635 = vadd.f32 %v1634, %v1400
        %v1636 = vadd.f32 %v1635, %v1424
        %v1637 = vadd.f32 %v1636, %v1448
        %v1638 = vadd.f32 %v1637, %v1472
        %v1639 = vadd.f32 %v1638, %v1496
        %v1640 = vadd.f32 %v1639, %v1520
        %v1641 = vadd.f32 %v1353, %v1377
        %v1642 = vadd.f32 %v1641, %v1401
        %v1643 = vadd.f32 %v1642, %v1425
        %v1644 = vadd.f32 %v1643, %v1449
        %v1645 = vadd.f32 %v1644, %v1473
        %v1646 = vadd.f32 %v1645, %v1497
        %v1647 = vadd.f32 %v1646, %v1521
        %v1648 = vadd.f32 %v1354, %v1378
        %v1649 = vadd.f32 %v1648, %v1402
        %v1650 = vadd.f32 %v1649, %v1426
        %v1651 = vadd.f32 %v1650, %v1450
        %v1652 = vadd.f32 %v1651, %v1474
        %v1653 = vadd.f32 %v1652, %v1498
        %v1654 = vadd.f32 %v1653, %v1522
        %v1655 = vadd.f32 %v1355, %v1379
        %v1656 = vadd.f32 %v1655, %v1403
        %v1657 = vadd.f32 %v1656, %v1427
        %v1658 = vadd.f32 %v1657, %v1451
        %v1659 = vadd.f32 %v1658, %v1475
        %v1660 = vadd.f32 %v1659, %v1499
        %v1661 = vadd.f32 %v1660, %v1523
        %v1662 = vadd.f32 %v1356, %v1380
        %v1663 = vadd.f32 %v1662, %v1404
        %v1664 = vadd.f32 %v1663, %v1428
        %v1665 = vadd.f32 %v1664, %v1452
        %v1666 = vadd.f32 %v1665, %v1476
        %v1667 = vadd.f32 %v1666, %v1500
        %v1668 = vadd.f32 %v1667, %v1524
        %v1669 = vadd.f32 %v1357, %v1381
        %v1670 = vadd.f32 %v1669, %v1405
        %v1671 = vadd.f32 %v1670, %v1429
        %v1672 = vadd.f32 %v1671, %v1453
        %v1673 = vadd.f32 %v1672, %v1477
        %v1674 = vadd.f32 %v1673, %v1501
        %v1675 = vadd.f32 %v1674, %v1525
        %v1676 = vadd.f32 %v1358, %v1382
        %v1677 = vadd.f32 %v1676, %v1406
        %v1678 = vadd.f32 %v1677, %v1430
        %v1679 = vadd.f32 %v1678, %v1454
        %v1680 = vadd.f32 %v1679, %v1478
        %v1681 = vadd.f32 %v1680, %v1502
        %v1682 = vadd.f32 %v1681, %v1526
        %v1683 = vadd.f32 %v1359, %v1383
        %v1684 = vadd.f32 %v1683, %v1407
        %v1685 = vadd.f32 %v1684, %v1431
        %v1686 = vadd.f32 %v1685, %v1455
        %v1687 = vadd.f32 %v1686, %v1479
        %v1688 = vadd.f32 %v1687, %v1503
        %v1689 = vadd.f32 %v1688, %v1527
        %v1690 = vadd.f32 %v1360, %v1384
        %v1691 = vadd.f32 %v1690, %v1408
        %v1692 = vadd.f32 %v1691, %v1432
        %v1693 = vadd.f32 %v1692, %v1456
        %v1694 = vadd.f32 %v1693, %v1480
        %v1695 = vadd.f32 %v1694, %v1504
        %v1696 = vadd.f32 %v1695, %v1528
        %v1697 = vadd.f32 %v1007, %v1535
        %v1698 = vadd.f32 %v1008, %v1542
        %v1699 = vadd.f32 %v1009, %v1549
        %v1700 = vadd.f32 %v1010, %v1556
        %v1701 = vadd.f32 %v1011, %v1563
        %v1702 = vadd.f32 %v1012, %v1570
        %v1703 = vadd.f32 %v1013, %v1577
        %v1704 = vadd.f32 %v1014, %v1584
        %v1705 = vadd.f32 %v1015, %v1591
        %v1706 = vadd.f32 %v1016, %v1598
        %v1707 = vadd.f32 %v1017, %v1605
        %v1708 = vadd.f32 %v1018, %v1612
        %v1709 = vadd.f32 %v1019, %v1619
        %v1710 = vadd.f32 %v1020, %v1626
        %v1711 = vadd.f32 %v1021, %v1633
        %v1712 = vadd.f32 %v1022, %v1640
        %v1713 = vadd.f32 %v1023, %v1647
        %v1714 = vadd.f32 %v1024, %v1654
        %v1715 = vadd.f32 %v1025, %v1661
        %v1716 = vadd.f32 %v1026, %v1668
        %v1717 = vadd.f32 %v1027, %v1675
        %v1718 = vadd.f32 %v1028, %v1682
        %v1719 = vadd.f32 %v1029, %v1689
        %v1720 = vadd.f32 %v1030, %v1696
        %1721 = vst [vmem:[%s970] sm:$0xff] %v1697
        %1722 = vst [vmem:[%s970 + $0x8] sm:$0xff] %v1698
        %1723 = vst [vmem:[%s970 + $0x10] sm:$0xff] %v1699
        %1724 = vst [vmem:[%s970 + $0x18] sm:$0xff] %v1700
        %1725 = vst [vmem:[%s970 + $0x20] sm:$0xff] %v1701
        %1726 = vst [vmem:[%s970 + $0x28] sm:$0xff] %v1702
        %1727 = vst [vmem:[%s970 + $0x30] sm:$0xff] %v1703
        %1728 = vst [vmem:[%s970 + $0x38] sm:$0xff] %v1704
        %1729 = vst [vmem:[%s970 + $0x40] sm:$0xff] %v1705
        %1730 = vst [vmem:[%s970 + $0x48] sm:$0xff] %v1706
        %1731 = vst [vmem:[%s970 + $0x50] sm:$0xff] %v1707
        %1732 = vst [vmem:[%s970 + $0x58] sm:$0xff] %v1708
        %1733 = vst [vmem:[%s970 + $0x60] sm:$0xff] %v1709
        %1734 = vst [vmem:[%s970 + $0x68] sm:$0xff] %v1710
        %1735 = vst [vmem:[%s970 + $0x70] sm:$0xff] %v1711
        %1736 = vst [vmem:[%s970 + $0x78] sm:$0xff] %v1712
        %1737 = vst [vmem:[%s970 + $0x80] sm:$0xff] %v1713
        %1738 = vst [vmem:[%s970 + $0x88] sm:$0xff] %v1714
        %1739 = vst [vmem:[%s970 + $0x90] sm:$0xff] %v1715
        %1740 = vst [vmem:[%s970 + $0x98] sm:$0xff] %v1716
        %1741 = vst [vmem:[%s970 + $0xa0] sm:$0xff] %v1717
        %1742 = vst [vmem:[%s970 + $0xa8] sm:$0xff] %v1718
        %1743 = vst [vmem:[%s970 + $0xb0] sm:$0xff] %v1719
        %1744 = vst [vmem:[%s970 + $0xb8] sm:$0xff] %v1720
        %s1745 = sand.u32 %s90, 1
        %s1746 = scalar_lea.sflag [#allocation4], %s1745
        %s1747 = sand.u32 %s90, 1
        %s1748 = smul.addr %s1747, 192
        %s1749 = scalar_lea.vmem [#allocation3], %s1748
        // Predicated region
        $region71: #{mem_forward.3} parent=61 // pred_check
          %p1750 = pneg %p100
        $region72: #{mem_forward.3} parent=61 // pred_check_branch
          %1752 = sbr.rel (%p1750) target = $region74
        $region73: #{mem_forward.3} parent=61 // pred_region
          %s1753 = smul.u32 24, %s20
          %s1755 = ssub.s32 3072, 3072
          %1756 = vsyncadd %s1746, %s1755
          %s1757 = smul.addr %s1753, 128
          %s1758 = scalar_lea.hbm %s2, %s1757
          %s1759 = sshll.u32 %s1749, 4
          %s1760 = int_to_ptr.vmem [resolvable:$true] %s1759
          %1765 = dma.vmem_to_hbm [thread:$0]  %s1760, 3072, %s1758, %s1746, 128, 128, 8
        $region74: #{mem_forward.3} parent=61 // pred_fallthru
          _
      $region62: #{mem_forward.3} parent=5 // pred_fallthru
        _
      %p1766 = scmp.le.s32.totalorder 2, %s11
      // Predicated region
      $region75: #{mem_forward.3} parent=5 // pred_check
        %p1767 = pneg %p1766
      $region76: #{mem_forward.3} parent=5 // pred_check_branch
        %1769 = sbr.rel (%p1767) target = $region78
      $region77: #{mem_forward.3} parent=5 // pred_region
        %s1770 = ssub.s32 %s11, 2
        // Predicated region
        $region79: #{mem_forward.3} parent=77 // pred_check
          %p1771 = pneg %p106
        $region80: #{mem_forward.3} parent=77 // pred_check_branch
          %1773 = sbr.rel (%p1771) target = $region82
        $region81: #{mem_forward.3} parent=77 // pred_region
          %s1774 = sand.u32 %s91, 1
          %s1775 = scalar_lea.sflag [#allocation4], %s1774
          %s1776 = sand.u32 %s91, 1
          %s1777 = smul.addr %s1776, 192
          %s1778 = scalar_lea.vmem [#allocation3], %s1777
          %1779 = dma.done %s1775, 3072
        $region82: #{mem_forward.3} parent=77 // pred_fallthru
          _
      $region78: #{mem_forward.3} parent=5 // pred_fallthru
        _
    $region6: #{mem_forward.3} parent=1 // loop_footer
      %s15 = sadd.s32 1, %s11
    $region7: #{mem_forward.3} parent=1 // loop_footer_branch
      %10 = sbr.rel target = $region3
    $region8: #{mem_forward.3} parent=1 // loop_exit
      _
    %1780 = vsyncpa [#allocation4], 1
    %s1781 = scalar_lea.sflag [#allocation4], 1
    %1782 = vsyncpa %s1781, 1

</llo_original>
